<compile_context>
chip_gen: v7x
topology: tpu7x:2x2x1
jax: 0.10.0
libtpu: 0.0.40
codegen_flags: <defaults>
</compile_context>

<pallas_src>
import functools
import math

import jax
import jax.numpy as jnp
from jax import lax
from jax.experimental import pallas as pl
from jax.experimental.pallas import tpu as pltpu

# Safe scoped-VMEM ceiling on v5e / v6e (128 MiB physical) and v7x (64 MiB physical).
_VMEM_LIMIT = 32 * 1024 * 1024


def _round_up(x, m):
    return ((x + m - 1) // m) * m


def _pick_tile(n, target, align):
    """Largest multiple of `align` <= target that evenly divides round_up(n, align)."""
    n_r = _round_up(n, align)
    best = align
    c = align
    while c <= min(target, n_r):
        if n_r % c == 0:
            best = c
        c += align
    return best


# --------------------------------------------------------------------------
# Linear kernel:  y = x @ W^T + b   (optional fused ReLU, configurable out dtype)
# --------------------------------------------------------------------------
def _linear_kernel(x_ref, w_ref, b_ref, o_ref, *, apply_relu):
    # x_ref: (tm, K) f32/bf16   w_ref: (tn, K) bf16   b_ref: (1, tn) f32   o_ref: (tm, tn)
    x = x_ref[...].astype(jnp.bfloat16)          # in-kernel cast (no-op if already bf16)
    acc = lax.dot_general(
        x, w_ref[...],
        dimension_numbers=(((1,), (1,)), ((), ())),   # contract K with K (W stays [N, K])
        preferred_element_type=jnp.float32,
    )
    acc = acc + b_ref[...]
    if apply_relu:
        acc = jnp.maximum(acc, 0.0)
    o_ref[...] = acc.astype(o_ref.dtype)


def linear(x2, weight_bf16, bias_f32_2d, *, apply_relu=False, out_dtype=jnp.float32,
           tm=512, tn=512):
    """x2: [M, K] (f32 or bf16); weight_bf16: [N, K] bf16; bias: [1, N] f32. Returns [M, N]."""
    M, K = x2.shape
    N = weight_bf16.shape[0]

    tm_e = min(tm, _round_up(M, 16))
    Mp = _round_up(M, tm_e)
    tn_e = _pick_tile(N, tn, 128)
    Np = _round_up(N, tn_e)

    xb = x2
    if Mp != M:
        xb = jnp.pad(xb, ((0, Mp - M), (0, 0)))
    wb = weight_bf16
    b2 = bias_f32_2d
    if Np != N:                                   # no-op for BERT dims (all 128-multiples)
        wb = jnp.pad(wb, ((0, Np - N), (0, 0)))
        b2 = jnp.pad(b2, ((0, 0), (0, Np - N)))

    grid = (Mp // tm_e, Np // tn_e)               # M outer, N inner -> x tile resident over N sweep

    x_bytes = jnp.dtype(xb.dtype).itemsize
    out_bytes = jnp.dtype(out_dtype).itemsize
    cost = pl.CostEstimate(
        flops=2 * Mp * K * Np,
        transcendentals=0,
        bytes_accessed=(Mp * K * x_bytes
                        + Np * K * 2 * grid[0]    # weight re-streamed once per M tile
                        + Np * 4
                        + Mp * Np * out_bytes),
    )

    out = pl.pallas_call(
        functools.partial(_linear_kernel, apply_relu=apply_relu),
        out_shape=jax.ShapeDtypeStruct((Mp, Np), out_dtype),
        grid_spec=pltpu.PrefetchScalarGridSpec(
            num_scalar_prefetch=0,
            grid=grid,
            in_specs=[
                pl.BlockSpec((tm_e, K), lambda i, j: (i, 0)),   # x: independent of j
                pl.BlockSpec((tn_e, K), lambda i, j: (j, 0)),   # W: [N, K] tiles, no transpose
                pl.BlockSpec((1, tn_e), lambda i, j: (0, j)),   # bias tile
            ],
            out_specs=pl.BlockSpec((tm_e, tn_e), lambda i, j: (i, j)),
        ),
        compiler_params=pltpu.CompilerParams(
            dimension_semantics=("parallel", "parallel"),
            vmem_limit_bytes=_VMEM_LIMIT,
        ),
        cost_estimate=cost,
    )(xb, wb, b2)

    if Mp != M or Np != N:
        out = out[:M, :N]
    return out


# --------------------------------------------------------------------------
# Fused residual-add + LayerNorm kernel (row-wise over the feature dim)
# --------------------------------------------------------------------------
def _add_layernorm_kernel(x_ref, r_ref, g_ref, b_ref, o_ref, *, eps):
    x = x_ref[...].astype(jnp.float32) + r_ref[...].astype(jnp.float32)
    mean = jnp.mean(x, axis=-1, keepdims=True)
    xc = x - mean
    var = jnp.mean(xc * xc, axis=-1, keepdims=True)
    inv = lax.rsqrt(var + eps)
    o_ref[...] = (xc * inv * g_ref[...] + b_ref[...]).astype(o_ref.dtype)


def add_layernorm(x2, res2, gamma_2d, beta_2d, *, eps=1e-5, tm=1024):
    """LayerNorm(x2 + res2); x2/res2: [M, H] f32; gamma/beta: [1, H] f32."""
    M, H = x2.shape
    tm_e = min(tm, _round_up(M, 8))
    Mp = _round_up(M, tm_e)
    xp = jnp.pad(x2, ((0, Mp - M), (0, 0))) if Mp != M else x2
    rp = jnp.pad(res2, ((0, Mp - M), (0, 0))) if Mp != M else res2

    cost = pl.CostEstimate(
        flops=10 * Mp * H,
        transcendentals=Mp,
        bytes_accessed=3 * Mp * H * 4 + 2 * H * 4,
    )

    out = pl.pallas_call(
        functools.partial(_add_layernorm_kernel, eps=eps),
        out_shape=jax.ShapeDtypeStruct((Mp, H), jnp.float32),
        grid_spec=pltpu.PrefetchScalarGridSpec(
            num_scalar_prefetch=0,
            grid=(Mp // tm_e,),
            in_specs=[
                pl.BlockSpec((tm_e, H), lambda i: (i, 0)),
                pl.BlockSpec((tm_e, H), lambda i: (i, 0)),
                pl.BlockSpec((1, H), lambda i: (0, 0)),
                pl.BlockSpec((1, H), lambda i: (0, 0)),
            ],
            out_specs=pl.BlockSpec((tm_e, H), lambda i: (i, 0)),
        ),
        compiler_params=pltpu.CompilerParams(
            dimension_semantics=("parallel",),
            vmem_limit_bytes=_VMEM_LIMIT,
        ),
        cost_estimate=cost,
    )(xp, rp, gamma_2d, beta_2d)
    return out[:M] if Mp != M else out


# --------------------------------------------------------------------------
# Attention core kernel: per batch, all heads packed; bf16 matmuls, f32 softmax.
# Reads the (S, 3H) QKV slab directly (no XLA head transposes), writes a
# lane-dense (S, H) output slab.
# --------------------------------------------------------------------------
def _attention_kernel(qkv_ref, o_ref, *, n_heads, head_dim, scale):
    H = n_heads * head_dim
    qkv = qkv_ref[...]                       # (S, 3H) bf16
    q = qkv[:, 0:H]
    k = qkv[:, H:2 * H]
    v = qkv[:, 2 * H:3 * H]
    outs = []
    for h in range(n_heads):
        sl = slice(h * head_dim, (h + 1) * head_dim)
        qh = q[:, sl]
        kh = k[:, sl]
        vh = v[:, sl]
        s = lax.dot_general(                 # (S, S) f32, bf16 inputs on the MXU
            qh, kh, dimension_numbers=(((1,), (1,)), ((), ())),
            preferred_element_type=jnp.float32,
        ) * scale
        m = jnp.max(s, axis=-1, keepdims=True)
        p = jnp.exp(s - m)
        l = jnp.sum(p, axis=-1, keepdims=True)
        o = jnp.dot(p.astype(jnp.bfloat16), vh, preferred_element_type=jnp.float32)
        o = o * pl.reciprocal(l, approx=True)
        outs.append(o)
    o_ref[...] = jnp.concatenate(outs, axis=-1).astype(o_ref.dtype)


def attention(qkv_bs3h, n_heads):
    """qkv_bs3h: (B, S, 3H) bf16 with [q | k | v] column layout. Returns (B, S, H) bf16."""
    # TODO(synk): for long sequences (S >> 512) add a flash-style KV loop with online
    # softmax instead of materializing the full (S, S) score matrix per head.
    B, S, H3 = qkv_bs3h.shape
    H = H3 // 3
    hd = H // n_heads
    scale = 1.0 / math.sqrt(hd)

    cost = pl.CostEstimate(
        flops=4 * B * n_heads * S * S * hd,
        transcendentals=B * n_heads * S * S,
        bytes_accessed=B * S * H3 * 2 + B * S * H * 2,
    )

    return pl.pallas_call(
        functools.partial(_attention_kernel, n_heads=n_heads, head_dim=hd, scale=scale),
        out_shape=jax.ShapeDtypeStruct((B, S, H), jnp.bfloat16),
        grid_spec=pltpu.PrefetchScalarGridSpec(
            num_scalar_prefetch=0,
            grid=(B,),
            in_specs=[pl.BlockSpec((None, S, H3), lambda b: (b, 0, 0))],
            out_specs=pl.BlockSpec((None, S, H), lambda b: (b, 0, 0)),
        ),
        compiler_params=pltpu.CompilerParams(
            dimension_semantics=("parallel",),
            vmem_limit_bytes=_VMEM_LIMIT,
        ),
        cost_estimate=cost,
    )(qkv_bs3h)


# --------------------------------------------------------------------------
# Model composition
# --------------------------------------------------------------------------
def embedding_forward(bin_ids, subbin_ids, bin_table, subbin_table):
    # TODO(synk): embedding gather stays in plain JAX (XLA gather); the external
    # `embedding` module isn't specified, so it is modeled as two summed lookup tables.
    return jnp.take(bin_table, bin_ids, axis=0) + jnp.take(subbin_table, subbin_ids, axis=0)


def transformer_layer(x, p, n_heads):
    B, S, H = x.shape
    x2 = x.reshape(B * S, H)

    # --- self-attention block (post-norm, dropout = identity at inference) ---
    qkv = linear(x2, p["in_proj_w"], p["in_proj_b"], out_dtype=jnp.bfloat16)   # (M, 3H) bf16
    attn = attention(qkv.reshape(B, S, 3 * H), n_heads)                        # (B, S, H) bf16
    attn = linear(attn.reshape(B * S, H), p["out_proj_w"], p["out_proj_b"],
                  out_dtype=jnp.float32)
    x2 = add_layernorm(x2, attn, p["ln1_g"], p["ln1_b"])

    # --- feed-forward block ---
    h = linear(x2, p["lin1_w"], p["lin1_b"], apply_relu=True, out_dtype=jnp.bfloat16)
    h = linear(h, p["lin2_w"], p["lin2_b"], out_dtype=jnp.float32)
    x2 = add_layernorm(x2, h, p["ln2_g"], p["ln2_b"])
    return x2.reshape(B, S, H)


def bert_forward(bin_ids, subbin_ids, params, n_heads):
    x = embedding_forward(bin_ids, subbin_ids, params["bin_emb"], params["subbin_emb"])
    for layer_p in params["layers"]:
        x = transformer_layer(x, layer_p, n_heads)
    return x


def prepare_params(params):
    """One-time cast: weights -> bf16, biases / LN params -> f32 (1, N). Not per-forward."""
    out = {
        "bin_emb": params["bin_emb"].astype(jnp.float32),
        "subbin_emb": params["subbin_emb"].astype(jnp.float32),
        "layers": [],
    }
    for p in params["layers"]:
        out["layers"].append({
            "in_proj_w": p["in_proj_w"].astype(jnp.bfloat16),
            "in_proj_b": p["in_proj_b"].astype(jnp.float32).reshape(1, -1),
            "out_proj_w": p["out_proj_w"].astype(jnp.bfloat16),
            "out_proj_b": p["out_proj_b"].astype(jnp.float32).reshape(1, -1),
            "ln1_g": p["ln1_g"].astype(jnp.float32).reshape(1, -1),
            "ln1_b": p["ln1_b"].astype(jnp.float32).reshape(1, -1),
            "lin1_w": p["lin1_w"].astype(jnp.bfloat16),
            "lin1_b": p["lin1_b"].astype(jnp.float32).reshape(1, -1),
            "lin2_w": p["lin2_w"].astype(jnp.bfloat16),
            "lin2_b": p["lin2_b"].astype(jnp.float32).reshape(1, -1),
            "ln2_g": p["ln2_g"].astype(jnp.float32).reshape(1, -1),
            "ln2_b": p["ln2_b"].astype(jnp.float32).reshape(1, -1),
        })
    return out


# --------------------------------------------------------------------------
# Pure-JAX reference (mirrors the kernel's precision policy: bf16 MXU, f32 acc)
# --------------------------------------------------------------------------
def _linear_ref(x2, w, b, relu=False, out_dtype=jnp.float32):
    y = jnp.dot(x2.astype(jnp.bfloat16), w.astype(jnp.bfloat16).T,
                preferred_element_type=jnp.float32) + b.astype(jnp.float32)
    if relu:
        y = jnp.maximum(y, 0.0)
    return y.astype(out_dtype)


def _layernorm_ref(x2, g, b, eps=1e-5):
    mean = jnp.mean(x2, axis=-1, keepdims=True)
    var = jnp.mean((x2 - mean) ** 2, axis=-1, keepdims=True)
    return (x2 - mean) * lax.rsqrt(var + eps) * g + b


def _attn_ref(qkv, n_heads):
    B, S, H3 = qkv.shape
    H = H3 // 3
    hd = H // n_heads
    q, k, v = jnp.split(qkv, 3, axis=-1)
    th = lambda t: t.reshape(B, S, n_heads, hd).transpose(0, 2, 1, 3)
    q, k, v = th(q), th(k), th(v)
    s = jnp.einsum('bhqd,bhkd->bhqk', q, k,
                   preferred_element_type=jnp.float32) / math.sqrt(hd)
    p = jax.nn.softmax(s, axis=-1)
    o = jnp.einsum('bhqk,bhkd->bhqd', p.astype(jnp.bfloat16), v,
                   preferred_element_type=jnp.float32)
    return o.transpose(0, 2, 1, 3).reshape(B, S, H).astype(jnp.bfloat16)


def bert_ref(bin_ids, subbin_ids, params, n_heads):
    x = embedding_forward(bin_ids, subbin_ids, params["bin_emb"], params["subbin_emb"])
    for p in params["layers"]:
        B, S, H = x.shape
        x2 = x.reshape(B * S, H)
        qkv = _linear_ref(x2, p["in_proj_w"], p["in_proj_b"], out_dtype=jnp.bfloat16)
        a = _attn_ref(qkv.reshape(B, S, 3 * H), n_heads).reshape(B * S, H)
        a = _linear_ref(a, p["out_proj_w"], p["out_proj_b"])
        x2 = _layernorm_ref(x2 + a, p["ln1_g"], p["ln1_b"])
        h = _linear_ref(x2, p["lin1_w"], p["lin1_b"], relu=True, out_dtype=jnp.bfloat16)
        h = _linear_ref(h, p["lin2_w"], p["lin2_b"])
        x2 = _layernorm_ref(x2 + h, p["ln2_g"], p["ln2_b"])
        x = x2.reshape(B, S, H)
    return x


# --------------------------------------------------------------------------
def init_params(key, *, hidden, n_layers, ffn, n_bins, n_subbins):
    keys = jax.random.split(key, 2 + n_layers)
    params = {
        "bin_emb": 0.02 * jax.random.normal(keys[0], (n_bins, hidden), jnp.float32),
        "subbin_emb": 0.02 * jax.random.normal(keys[1], (n_subbins, hidden), jnp.float32),
        "layers": [],
    }
    s = 0.05
    for l in range(n_layers):
        ks = jax.random.split(keys[2 + l], 12)
        params["layers"].append({
            "in_proj_w": s * jax.random.normal(ks[0], (3 * hidden, hidden), jnp.float32),
            "in_proj_b": s * jax.random.normal(ks[1], (3 * hidden,), jnp.float32),
            "out_proj_w": s * jax.random.normal(ks[2], (hidden, hidden), jnp.float32),
            "out_proj_b": s * jax.random.normal(ks[3], (hidden,), jnp.float32),
            "ln1_g": 1.0 + 0.1 * jax.random.normal(ks[4], (hidden,), jnp.float32),
            "ln1_b": 0.1 * jax.random.normal(ks[5], (hidden,), jnp.float32),
            "lin1_w": s * jax.random.normal(ks[6], (ffn, hidden), jnp.float32),
            "lin1_b": s * jax.random.normal(ks[7], (ffn,), jnp.float32),
            "lin2_w": s * jax.random.normal(ks[8], (hidden, ffn), jnp.float32),
            "lin2_b": s * jax.random.normal(ks[9], (hidden,), jnp.float32),
            "ln2_g": 1.0 + 0.1 * jax.random.normal(ks[10], (hidden,), jnp.float32),
            "ln2_b": 0.1 * jax.random.normal(ks[11], (hidden,), jnp.float32),
        })
    return params


if __name__ == "__main__":
    # Small shapes consistent with the module: [batch, seq] token ids -> [batch, seq, hidden]
    batch, seq = 2, 8
    hidden, n_heads, n_layers, ffn = 128, 4, 2, 256
    n_bins, n_subbins = 64, 16

    key = jax.random.PRNGKey(0)
    k_ids1, k_ids2, k_params = jax.random.split(key, 3)

    bin_ids = jax.random.randint(k_ids1, (batch, seq), 0, n_bins, dtype=jnp.int32)
    subbin_ids = jax.random.randint(k_ids2, (batch, seq), 0, n_subbins, dtype=jnp.int32)
    raw_params = init_params(k_params, hidden=hidden, n_layers=n_layers, ffn=ffn,
                             n_bins=n_bins, n_subbins=n_subbins)
    params = prepare_params(raw_params)   # one-time bf16 weight cast / bias reshape

    fwd = jax.jit(lambda b, s: bert_forward(b, s, params, n_heads))
    y = jax.block_until_ready(fwd(bin_ids, subbin_ids))

    y_ref = bert_ref(bin_ids, subbin_ids, params, n_heads)

    assert y.shape == (batch, seq, hidden)
    assert bool(jnp.all(jnp.isfinite(y)))
    assert jnp.allclose(y, y_ref, atol=1e-2, rtol=1e-2), "mismatch vs reference"

    print("KERNEL_OK")
</pallas_src>

<mosaic_0001>
module attributes {stable_mosaic.version = 11 : i64} {
  func.func @_linear_kernel(%arg0: i32, %arg1: i32, %arg2: memref<16x128xf32, #tpu.memory_space<vmem>>, %arg3: memref<384x128xbf16, #tpu.memory_space<vmem>>, %arg4: memref<1x384xf32, #tpu.memory_space<vmem>>, %arg5: memref<16x384xbf16, #tpu.memory_space<vmem>>) attributes {dimension_semantics = [#tpu.dimension_semantics<parallel>, #tpu.dimension_semantics<parallel>], iteration_bounds = array<i64: 1, 1>, scalar_prefetch = 0 : i64, scratch_operands = 0 : i64, tpu.core_type = #tpu.core_type<tc>, window_params = [{transform_indices = @transform_0, window_bounds = array<i64: 16, 128>}, {transform_indices = @transform_1, window_bounds = array<i64: 384, 128>}, {transform_indices = @transform_2, window_bounds = array<i64: 1, 384>}, {transform_indices = @transform_3, window_bounds = array<i64: 16, 384>}]} {
    %c0 = arith.constant 0 : index
    %c0_0 = arith.constant 0 : index
    %0 = vector.load %arg2[%c0, %c0_0] : memref<16x128xf32, #tpu.memory_space<vmem>>, vector<16x128xf32>
    %1 = arith.truncf %0 : vector<16x128xf32> to vector<16x128xbf16>
    %c0_1 = arith.constant 0 : index
    %c0_2 = arith.constant 0 : index
    %2 = vector.load %arg3[%c0_1, %c0_2] : memref<384x128xbf16, #tpu.memory_space<vmem>>, vector<384x128xbf16>
    %cst = arith.constant dense<0.000000e+00> : vector<16x384xf32>
    %3 = tpu.matmul %1, %2, %cst {dimension_numbers = #tpu.dot_dimension_numbers<[1], [1], [0], [0], [0, 0, 1, 0], [], []>} : vector<16x128xbf16>, vector<384x128xbf16>, vector<16x384xf32> -> vector<16x384xf32>
    %c0_3 = arith.constant 0 : index
    %c0_4 = arith.constant 0 : index
    %4 = vector.load %arg4[%c0_3, %c0_4] : memref<1x384xf32, #tpu.memory_space<vmem>>, vector<1x384xf32>
    %5 = vector.broadcast %4 : vector<1x384xf32> to vector<16x384xf32>
    %6 = arith.addf %3, %5 : vector<16x384xf32>
    %7 = arith.truncf %6 : vector<16x384xf32> to vector<16x384xbf16>
    %c0_5 = arith.constant 0 : index
    %c0_6 = arith.constant 0 : index
    %8 = vector.load %arg5[%c0_5, %c0_6] : memref<16x384xbf16, #tpu.memory_space<vmem>>, vector<16x384xbf16>
    tpu.vector_store %arg5[%c0_5, %c0_6], %7 {strides = array<i32>} : memref<16x384xbf16, #tpu.memory_space<vmem>>, vector<16x384xbf16>,
    return
  }
  func.func @transform_0(%arg0: i32, %arg1: i32) -> (i32, i32) {
    %c0_i32 = arith.constant 0 : i32
    %c0_i32_0 = arith.constant 0 : i32
    return %arg0, %c0_i32 : i32, i32
  }
  func.func @transform_1(%arg0: i32, %arg1: i32) -> (i32, i32) {
    %c0_i32 = arith.constant 0 : i32
    %c0_i32_0 = arith.constant 0 : i32
    return %arg1, %c0_i32 : i32, i32
  }
  func.func @transform_2(%arg0: i32, %arg1: i32) -> (i32, i32) {
    %c0_i32 = arith.constant 0 : i32
    %c0_i32_0 = arith.constant 0 : i32
    return %c0_i32, %arg1 : i32, i32
  }
  func.func @transform_3(%arg0: i32, %arg1: i32) -> (i32, i32) {
    %c0_i32 = arith.constant 0 : i32
    return %arg0, %arg1 : i32, i32
  }
}

module attributes {stable_mosaic.version = 11 : i64} {
  func.func @_linear_kernel(%arg0: i32, %arg1: i32, %arg2: memref<16x128xbf16, #tpu.memory_space<vmem>>, %arg3: memref<128x128xbf16, #tpu.memory_space<vmem>>, %arg4: memref<1x128xf32, #tpu.memory_space<vmem>>, %arg5: memref<16x128xf32, #tpu.memory_space<vmem>>) attributes {dimension_semantics = [#tpu.dimension_semantics<parallel>, #tpu.dimension_semantics<parallel>], iteration_bounds = array<i64: 1, 1>, scalar_prefetch = 0 : i64, scratch_operands = 0 : i64, tpu.core_type = #tpu.core_type<tc>, window_params = [{transform_indices = @transform_0, window_bounds = array<i64: 16, 128>}, {transform_indices = @transform_1, window_bounds = array<i64: 128, 128>}, {transform_indices = @transform_2, window_bounds = array<i64: 1, 128>}, {transform_indices = @transform_3, window_bounds = array<i64: 16, 128>}]} {
    %c0 = arith.constant 0 : index
    %c0_0 = arith.constant 0 : index
    %0 = vector.load %arg2[%c0, %c0_0] : memref<16x128xbf16, #tpu.memory_space<vmem>>, vector<16x128xbf16>
    %c0_1 = arith.constant 0 : index
    %c0_2 = arith.constant 0 : index
    %1 = vector.load %arg3[%c0_1, %c0_2] : memref<128x128xbf16, #tpu.memory_space<vmem>>, vector<128x128xbf16>
    %cst = arith.constant dense<0.000000e+00> : vector<16x128xf32>
    %2 = tpu.matmul %0, %1, %cst {dimension_numbers = #tpu.dot_dimension_numbers<[1], [1], [0], [0], [0, 0, 1, 0], [], []>} : vector<16x128xbf16>, vector<128x128xbf16>, vector<16x128xf32> -> vector<16x128xf32>
    %c0_3 = arith.constant 0 : index
    %c0_4 = arith.constant 0 : index
    %3 = vector.load %arg4[%c0_3, %c0_4] : memref<1x128xf32, #tpu.memory_space<vmem>>, vector<1x128xf32>
    %4 = vector.broadcast %3 : vector<1x128xf32> to vector<16x128xf32>
    %5 = arith.addf %2, %4 : vector<16x128xf32>
    %c0_5 = arith.constant 0 : index
    %c0_6 = arith.constant 0 : index
    %6 = vector.load %arg5[%c0_5, %c0_6] : memref<16x128xf32, #tpu.memory_space<vmem>>, vector<16x128xf32>
    tpu.vector_store %arg5[%c0_5, %c0_6], %5 {strides = array<i32>} : memref<16x128xf32, #tpu.memory_space<vmem>>, vector<16x128xf32>,
    return
  }
  func.func @transform_0(%arg0: i32, %arg1: i32) -> (i32, i32) {
    %c0_i32 = arith.constant 0 : i32
    %c0_i32_0 = arith.constant 0 : i32
    return %arg0, %c0_i32 : i32, i32
  }
  func.func @transform_1(%arg0: i32, %arg1: i32) -> (i32, i32) {
    %c0_i32 = arith.constant 0 : i32
    %c0_i32_0 = arith.constant 0 : i32
    return %arg1, %c0_i32 : i32, i32
  }
  func.func @transform_2(%arg0: i32, %arg1: i32) -> (i32, i32) {
    %c0_i32 = arith.constant 0 : i32
    %c0_i32_0 = arith.constant 0 : i32
    return %c0_i32, %arg1 : i32, i32
  }
  func.func @transform_3(%arg0: i32, %arg1: i32) -> (i32, i32) {
    %c0_i32 = arith.constant 0 : i32
    return %arg0, %arg1 : i32, i32
  }
}

module attributes {stable_mosaic.version = 11 : i64} {
  func.func @_add_layernorm_kernel(%arg0: i32, %arg1: memref<16x128xf32, #tpu.memory_space<vmem>>, %arg2: memref<16x128xf32, #tpu.memory_space<vmem>>, %arg3: memref<1x128xf32, #tpu.memory_space<vmem>>, %arg4: memref<1x128xf32, #tpu.memory_space<vmem>>, %arg5: memref<16x128xf32, #tpu.memory_space<vmem>>) attributes {dimension_semantics = [#tpu.dimension_semantics<parallel>], iteration_bounds = array<i64: 1>, scalar_prefetch = 0 : i64, scratch_operands = 0 : i64, tpu.core_type = #tpu.core_type<tc>, window_params = [{transform_indices = @transform_0, window_bounds = array<i64: 16, 128>}, {transform_indices = @transform_1, window_bounds = array<i64: 16, 128>}, {pipeline_mode = #tpu.pipeline_mode<synchronous>, transform_indices = @transform_2, window_bounds = array<i64: 1, 128>}, {pipeline_mode = #tpu.pipeline_mode<synchronous>, transform_indices = @transform_3, window_bounds = array<i64: 1, 128>}, {transform_indices = @transform_4, window_bounds = array<i64: 16, 128>}]} {
    %c0 = arith.constant 0 : index
    %c0_0 = arith.constant 0 : index
    %0 = vector.load %arg1[%c0, %c0_0] : memref<16x128xf32, #tpu.memory_space<vmem>>, vector<16x128xf32>
    %c0_1 = arith.constant 0 : index
    %c0_2 = arith.constant 0 : index
    %1 = vector.load %arg2[%c0_1, %c0_2] : memref<16x128xf32, #tpu.memory_space<vmem>>, vector<16x128xf32>
    %2 = arith.addf %0, %1 : vector<16x128xf32>
    %cst = arith.constant dense<0.000000e+00> : vector<16xf32>
    %3 = vector.multi_reduction <add>, %2, %cst [1] : vector<16x128xf32> to vector<16xf32>
    %4 = vector.shape_cast %3 : vector<16xf32> to vector<16x1xf32>
    %cst_3 = arith.constant 1.280000e+02 : f32
    %5 = vector.broadcast %cst_3 : f32 to vector<16x1xf32>
    %6 = arith.divf %4, %5 : vector<16x1xf32>
    %7 = vector.broadcast %6 : vector<16x1xf32> to vector<16x128xf32>
    %8 = arith.subf %2, %7 : vector<16x128xf32>
    %9 = arith.mulf %8, %8 : vector<16x128xf32>
    %cst_4 = arith.constant dense<0.000000e+00> : vector<16xf32>
    %10 = vector.multi_reduction <add>, %9, %cst_4 [1] : vector<16x128xf32> to vector<16xf32>
    %11 = vector.shape_cast %10 : vector<16xf32> to vector<16x1xf32>
    %cst_5 = arith.constant 1.280000e+02 : f32
    %12 = vector.broadcast %cst_5 : f32 to vector<16x1xf32>
    %13 = arith.divf %11, %12 : vector<16x1xf32>
    %cst_6 = arith.constant 9.99999974E-6 : f32
    %14 = vector.broadcast %cst_6 : f32 to vector<16x1xf32>
    %15 = arith.addf %13, %14 : vector<16x1xf32>
    %16 = math.rsqrt %15 : vector<16x1xf32>
    %17 = vector.broadcast %16 : vector<16x1xf32> to vector<16x128xf32>
    %18 = arith.mulf %8, %17 : vector<16x128xf32>
    %c0_7 = arith.constant 0 : index
    %c0_8 = arith.constant 0 : index
    %19 = vector.load %arg3[%c0_7, %c0_8] : memref<1x128xf32, #tpu.memory_space<vmem>>, vector<1x128xf32>
    %20 = vector.broadcast %19 : vector<1x128xf32> to vector<16x128xf32>
    %21 = arith.mulf %18, %20 : vector<16x128xf32>
    %c0_9 = arith.constant 0 : index
    %c0_10 = arith.constant 0 : index
    %22 = vector.load %arg4[%c0_9, %c0_10] : memref<1x128xf32, #tpu.memory_space<vmem>>, vector<1x128xf32>
    %23 = vector.broadcast %22 : vector<1x128xf32> to vector<16x128xf32>
    %24 = arith.addf %21, %23 : vector<16x128xf32>
    %c0_11 = arith.constant 0 : index
    %c0_12 = arith.constant 0 : index
    %25 = vector.load %arg5[%c0_11, %c0_12] : memref<16x128xf32, #tpu.memory_space<vmem>>, vector<16x128xf32>
    tpu.vector_store %arg5[%c0_11, %c0_12], %24 {strides = array<i32>} : memref<16x128xf32, #tpu.memory_space<vmem>>, vector<16x128xf32>,
    return
  }
  func.func @transform_0(%arg0: i32) -> (i32, i32) {
    %c0_i32 = arith.constant 0 : i32
    %c0_i32_0 = arith.constant 0 : i32
    return %arg0, %c0_i32 : i32, i32
  }
  func.func @transform_1(%arg0: i32) -> (i32, i32) {
    %c0_i32 = arith.constant 0 : i32
    %c0_i32_0 = arith.constant 0 : i32
    return %arg0, %c0_i32 : i32, i32
  }
  func.func @transform_2(%arg0: i32) -> (i32, i32) {
    %c0_i32 = arith.constant 0 : i32
    %c0_i32_0 = arith.constant 0 : i32
    %c0_i32_1 = arith.constant 0 : i32
    return %c0_i32, %c0_i32_0 : i32, i32
  }
  func.func @transform_3(%arg0: i32) -> (i32, i32) {
    %c0_i32 = arith.constant 0 : i32
    %c0_i32_0 = arith.constant 0 : i32
    %c0_i32_1 = arith.constant 0 : i32
    return %c0_i32, %c0_i32_0 : i32, i32
  }
  func.func @transform_4(%arg0: i32) -> (i32, i32) {
    %c0_i32 = arith.constant 0 : i32
    %c0_i32_0 = arith.constant 0 : i32
    return %arg0, %c0_i32 : i32, i32
  }
}

module attributes {stable_mosaic.version = 11 : i64} {
  func.func @_attention_kernel(%arg0: i32, %arg1: memref<1x8x384xbf16, #tpu.memory_space<vmem>>, %arg2: memref<1x8x128xbf16, #tpu.memory_space<vmem>>) attributes {dimension_semantics = [#tpu.dimension_semantics<parallel>], iteration_bounds = array<i64: 2>, scalar_prefetch = 0 : i64, scratch_operands = 0 : i64, tpu.core_type = #tpu.core_type<tc>, window_params = [{transform_indices = @transform_0, window_bounds = array<i64: 1, 8, 384>}, {transform_indices = @transform_1, window_bounds = array<i64: 1, 8, 128>}]} {
    %c0 = arith.constant 0 : index
    %c0_0 = arith.constant 0 : index
    %c0_1 = arith.constant 0 : index
    %0 = vector.load %arg1[%c0, %c0_0, %c0_1] : memref<1x8x384xbf16, #tpu.memory_space<vmem>>, vector<1x8x384xbf16>
    %1 = vector.shape_cast %0 : vector<1x8x384xbf16> to vector<8x384xbf16>
    %2 = vector.extract_strided_slice %1 {offsets = [0, 0], sizes = [8, 128], strides = [1, 1]} : vector<8x384xbf16> to vector<8x128xbf16>
    %3 = vector.extract_strided_slice %1 {offsets = [0, 128], sizes = [8, 128], strides = [1, 1]} : vector<8x384xbf16> to vector<8x128xbf16>
    %4 = vector.extract_strided_slice %1 {offsets = [0, 256], sizes = [8, 128], strides = [1, 1]} : vector<8x384xbf16> to vector<8x128xbf16>
    %5 = vector.extract_strided_slice %2 {offsets = [0, 0], sizes = [8, 32], strides = [1, 1]} : vector<8x128xbf16> to vector<8x32xbf16>
    %6 = vector.extract_strided_slice %3 {offsets = [0, 0], sizes = [8, 32], strides = [1, 1]} : vector<8x128xbf16> to vector<8x32xbf16>
    %7 = vector.extract_strided_slice %4 {offsets = [0, 0], sizes = [8, 32], strides = [1, 1]} : vector<8x128xbf16> to vector<8x32xbf16>
    %cst = arith.constant dense<0.000000e+00> : vector<8x8xf32>
    %8 = tpu.matmul %5, %6, %cst {dimension_numbers = #tpu.dot_dimension_numbers<[1], [1], [0], [0], [0, 0, 1, 0], [], []>} : vector<8x32xbf16>, vector<8x32xbf16>, vector<8x8xf32> -> vector<8x8xf32>
    %cst_2 = arith.constant 0.176776692 : f32
    %9 = vector.broadcast %cst_2 : f32 to vector<8x8xf32>
    %10 = arith.mulf %8, %9 : vector<8x8xf32>
    %cst_3 = arith.constant dense<0xFF800000> : vector<8xf32>
    %11 = vector.multi_reduction <maximumf>, %10, %cst_3 [1] : vector<8x8xf32> to vector<8xf32>
    %12 = vector.shape_cast %11 : vector<8xf32> to vector<8x1xf32>
    %13 = vector.broadcast %12 : vector<8x1xf32> to vector<8x8xf32>
    %14 = arith.subf %10, %13 : vector<8x8xf32>
    %15 = math.exp %14 : vector<8x8xf32>
    %cst_4 = arith.constant dense<0.000000e+00> : vector<8xf32>
    %16 = vector.multi_reduction <add>, %15, %cst_4 [1] : vector<8x8xf32> to vector<8xf32>
    %17 = vector.shape_cast %16 : vector<8xf32> to vector<8x1xf32>
    %18 = arith.truncf %15 : vector<8x8xf32> to vector<8x8xbf16>
    %cst_5 = arith.constant dense<0.000000e+00> : vector<8x32xf32>
    %19 = tpu.matmul %18, %7, %cst_5 {dimension_numbers = #tpu.dot_dimension_numbers<[1], [0], [0], [1], [0, 0, 1, 1], [], []>} : vector<8x8xbf16>, vector<8x32xbf16>, vector<8x32xf32> -> vector<8x32xf32>
    %20 = tpu.reciprocal %17 {approx = true} : vector<8x1xf32> -> vector<8x1xf32>
    %21 = vector.broadcast %20 : vector<8x1xf32> to vector<8x32xf32>
    %22 = arith.mulf %19, %21 : vector<8x32xf32>
    %23 = vector.extract_strided_slice %2 {offsets = [0, 32], sizes = [8, 32], strides = [1, 1]} : vector<8x128xbf16> to vector<8x32xbf16>
    %24 = vector.extract_strided_slice %3 {offsets = [0, 32], sizes = [8, 32], strides = [1, 1]} : vector<8x128xbf16> to vector<8x32xbf16>
    %25 = vector.extract_strided_slice %4 {offsets = [0, 32], sizes = [8, 32], strides = [1, 1]} : vector<8x128xbf16> to vector<8x32xbf16>
    %cst_6 = arith.constant dense<0.000000e+00> : vector<8x8xf32>
    %26 = tpu.matmul %23, %24, %cst_6 {dimension_numbers = #tpu.dot_dimension_numbers<[1], [1], [0], [0], [0, 0, 1, 0], [], []>} : vector<8x32xbf16>, vector<8x32xbf16>, vector<8x8xf32> -> vector<8x8xf32>
    %cst_7 = arith.constant 0.176776692 : f32
    %27 = vector.broadcast %cst_7 : f32 to vector<8x8xf32>
    %28 = arith.mulf %26, %27 : vector<8x8xf32>
    %cst_8 = arith.constant dense<0xFF800000> : vector<8xf32>
    %29 = vector.multi_reduction <maximumf>, %28, %cst_8 [1] : vector<8x8xf32> to vector<8xf32>
    %30 = vector.shape_cast %29 : vector<8xf32> to vector<8x1xf32>
    %31 = vector.broadcast %30 : vector<8x1xf32> to vector<8x8xf32>
    %32 = arith.subf %28, %31 : vector<8x8xf32>
    %33 = math.exp %32 : vector<8x8xf32>
    %cst_9 = arith.constant dense<0.000000e+00> : vector<8xf32>
    %34 = vector.multi_reduction <add>, %33, %cst_9 [1] : vector<8x8xf32> to vector<8xf32>
    %35 = vector.shape_cast %34 : vector<8xf32> to vector<8x1xf32>
    %36 = arith.truncf %33 : vector<8x8xf32> to vector<8x8xbf16>
    %cst_10 = arith.constant dense<0.000000e+00> : vector<8x32xf32>
    %37 = tpu.matmul %36, %25, %cst_10 {dimension_numbers = #tpu.dot_dimension_numbers<[1], [0], [0], [1], [0, 0, 1, 1], [], []>} : vector<8x8xbf16>, vector<8x32xbf16>, vector<8x32xf32> -> vector<8x32xf32>
    %38 = tpu.reciprocal %35 {approx = true} : vector<8x1xf32> -> vector<8x1xf32>
    %39 = vector.broadcast %38 : vector<8x1xf32> to vector<8x32xf32>
    %40 = arith.mulf %37, %39 : vector<8x32xf32>
    %41 = vector.extract_strided_slice %2 {offsets = [0, 64], sizes = [8, 32], strides = [1, 1]} : vector<8x128xbf16> to vector<8x32xbf16>
    %42 = vector.extract_strided_slice %3 {offsets = [0, 64], sizes = [8, 32], strides = [1, 1]} : vector<8x128xbf16> to vector<8x32xbf16>
    %43 = vector.extract_strided_slice %4 {offsets = [0, 64], sizes = [8, 32], strides = [1, 1]} : vector<8x128xbf16> to vector<8x32xbf16>
    %cst_11 = arith.constant dense<0.000000e+00> : vector<8x8xf32>
    %44 = tpu.matmul %41, %42, %cst_11 {dimension_numbers = #tpu.dot_dimension_numbers<[1], [1], [0], [0], [0, 0, 1, 0], [], []>} : vector<8x32xbf16>, vector<8x32xbf16>, vector<8x8xf32> -> vector<8x8xf32>
    %cst_12 = arith.constant 0.176776692 : f32
    %45 = vector.broadcast %cst_12 : f32 to vector<8x8xf32>
    %46 = arith.mulf %44, %45 : vector<8x8xf32>
    %cst_13 = arith.constant dense<0xFF800000> : vector<8xf32>
    %47 = vector.multi_reduction <maximumf>, %46, %cst_13 [1] : vector<8x8xf32> to vector<8xf32>
    %48 = vector.shape_cast %47 : vector<8xf32> to vector<8x1xf32>
    %49 = vector.broadcast %48 : vector<8x1xf32> to vector<8x8xf32>
    %50 = arith.subf %46, %49 : vector<8x8xf32>
    %51 = math.exp %50 : vector<8x8xf32>
    %cst_14 = arith.constant dense<0.000000e+00> : vector<8xf32>
    %52 = vector.multi_reduction <add>, %51, %cst_14 [1] : vector<8x8xf32> to vector<8xf32>
    %53 = vector.shape_cast %52 : vector<8xf32> to vector<8x1xf32>
    %54 = arith.truncf %51 : vector<8x8xf32> to vector<8x8xbf16>
    %cst_15 = arith.constant dense<0.000000e+00> : vector<8x32xf32>
    %55 = tpu.matmul %54, %43, %cst_15 {dimension_numbers = #tpu.dot_dimension_numbers<[1], [0], [0], [1], [0, 0, 1, 1], [], []>} : vector<8x8xbf16>, vector<8x32xbf16>, vector<8x32xf32> -> vector<8x32xf32>
    %56 = tpu.reciprocal %53 {approx = true} : vector<8x1xf32> -> vector<8x1xf32>
    %57 = vector.broadcast %56 : vector<8x1xf32> to vector<8x32xf32>
    %58 = arith.mulf %55, %57 : vector<8x32xf32>
    %59 = vector.extract_strided_slice %2 {offsets = [0, 96], sizes = [8, 32], strides = [1, 1]} : vector<8x128xbf16> to vector<8x32xbf16>
    %60 = vector.extract_strided_slice %3 {offsets = [0, 96], sizes = [8, 32], strides = [1, 1]} : vector<8x128xbf16> to vector<8x32xbf16>
    %61 = vector.extract_strided_slice %4 {offsets = [0, 96], sizes = [8, 32], strides = [1, 1]} : vector<8x128xbf16> to vector<8x32xbf16>
    %cst_16 = arith.constant dense<0.000000e+00> : vector<8x8xf32>
    %62 = tpu.matmul %59, %60, %cst_16 {dimension_numbers = #tpu.dot_dimension_numbers<[1], [1], [0], [0], [0, 0, 1, 0], [], []>} : vector<8x32xbf16>, vector<8x32xbf16>, vector<8x8xf32> -> vector<8x8xf32>
    %cst_17 = arith.constant 0.176776692 : f32
    %63 = vector.broadcast %cst_17 : f32 to vector<8x8xf32>
    %64 = arith.mulf %62, %63 : vector<8x8xf32>
    %cst_18 = arith.constant dense<0xFF800000> : vector<8xf32>
    %65 = vector.multi_reduction <maximumf>, %64, %cst_18 [1] : vector<8x8xf32> to vector<8xf32>
    %66 = vector.shape_cast %65 : vector<8xf32> to vector<8x1xf32>
    %67 = vector.broadcast %66 : vector<8x1xf32> to vector<8x8xf32>
    %68 = arith.subf %64, %67 : vector<8x8xf32>
    %69 = math.exp %68 : vector<8x8xf32>
    %cst_19 = arith.constant dense<0.000000e+00> : vector<8xf32>
    %70 = vector.multi_reduction <add>, %69, %cst_19 [1] : vector<8x8xf32> to vector<8xf32>
    %71 = vector.shape_cast %70 : vector<8xf32> to vector<8x1xf32>
    %72 = arith.truncf %69 : vector<8x8xf32> to vector<8x8xbf16>
    %cst_20 = arith.constant dense<0.000000e+00> : vector<8x32xf32>
    %73 = tpu.matmul %72, %61, %cst_20 {dimension_numbers = #tpu.dot_dimension_numbers<[1], [0], [0], [1], [0, 0, 1, 1], [], []>} : vector<8x8xbf16>, vector<8x32xbf16>, vector<8x32xf32> -> vector<8x32xf32>
    %74 = tpu.reciprocal %71 {approx = true} : vector<8x1xf32> -> vector<8x1xf32>
    %75 = vector.broadcast %74 : vector<8x1xf32> to vector<8x32xf32>
    %76 = arith.mulf %73, %75 : vector<8x32xf32>
    %77 = tpu.concatenate %22, %40, %58, %76 in 1 : vector<8x32xf32>, vector<8x32xf32>, vector<8x32xf32>, vector<8x32xf32> -> vector<8x128xf32>
    %78 = arith.truncf %77 : vector<8x128xf32> to vector<8x128xbf16>
    %c0_21 = arith.constant 0 : index
    %c0_22 = arith.constant 0 : index
    %c0_23 = arith.constant 0 : index
    %79 = vector.load %arg2[%c0_21, %c0_22, %c0_23] : memref<1x8x128xbf16, #tpu.memory_space<vmem>>, vector<1x8x128xbf16>
    %80 = vector.shape_cast %79 : vector<1x8x128xbf16> to vector<8x128xbf16>
    %81 = vector.shape_cast %78 : vector<8x128xbf16> to vector<1x8x128xbf16>
    tpu.vector_store %arg2[%c0_21, %c0_22, %c0_23], %81 {strides = array<i32>} : memref<1x8x128xbf16, #tpu.memory_space<vmem>>, vector<1x8x128xbf16>,
    return
  }
  func.func @transform_0(%arg0: i32) -> (i32, i32, i32) {
    %c0_i32 = arith.constant 0 : i32
    %c0_i32_0 = arith.constant 0 : i32
    %c0_i32_1 = arith.constant 0 : i32
    return %arg0, %c0_i32, %c0_i32_0 : i32, i32, i32
  }
  func.func @transform_1(%arg0: i32) -> (i32, i32, i32) {
    %c0_i32 = arith.constant 0 : i32
    %c0_i32_0 = arith.constant 0 : i32
    %c0_i32_1 = arith.constant 0 : i32
    return %arg0, %c0_i32, %c0_i32_0 : i32, i32, i32
  }
}

module attributes {stable_mosaic.version = 11 : i64} {
  func.func @_linear_kernel(%arg0: i32, %arg1: i32, %arg2: memref<16x128xf32, #tpu.memory_space<vmem>>, %arg3: memref<256x128xbf16, #tpu.memory_space<vmem>>, %arg4: memref<1x256xf32, #tpu.memory_space<vmem>>, %arg5: memref<16x256xbf16, #tpu.memory_space<vmem>>) attributes {dimension_semantics = [#tpu.dimension_semantics<parallel>, #tpu.dimension_semantics<parallel>], iteration_bounds = array<i64: 1, 1>, scalar_prefetch = 0 : i64, scratch_operands = 0 : i64, tpu.core_type = #tpu.core_type<tc>, window_params = [{transform_indices = @transform_0, window_bounds = array<i64: 16, 128>}, {transform_indices = @transform_1, window_bounds = array<i64: 256, 128>}, {transform_indices = @transform_2, window_bounds = array<i64: 1, 256>}, {transform_indices = @transform_3, window_bounds = array<i64: 16, 256>}]} {
    %c0 = arith.constant 0 : index
    %c0_0 = arith.constant 0 : index
    %0 = vector.load %arg2[%c0, %c0_0] : memref<16x128xf32, #tpu.memory_space<vmem>>, vector<16x128xf32>
    %1 = arith.truncf %0 : vector<16x128xf32> to vector<16x128xbf16>
    %c0_1 = arith.constant 0 : index
    %c0_2 = arith.constant 0 : index
    %2 = vector.load %arg3[%c0_1, %c0_2] : memref<256x128xbf16, #tpu.memory_space<vmem>>, vector<256x128xbf16>
    %cst = arith.constant dense<0.000000e+00> : vector<16x256xf32>
    %3 = tpu.matmul %1, %2, %cst {dimension_numbers = #tpu.dot_dimension_numbers<[1], [1], [0], [0], [0, 0, 1, 0], [], []>} : vector<16x128xbf16>, vector<256x128xbf16>, vector<16x256xf32> -> vector<16x256xf32>
    %c0_3 = arith.constant 0 : index
    %c0_4 = arith.constant 0 : index
    %4 = vector.load %arg4[%c0_3, %c0_4] : memref<1x256xf32, #tpu.memory_space<vmem>>, vector<1x256xf32>
    %5 = vector.broadcast %4 : vector<1x256xf32> to vector<16x256xf32>
    %6 = arith.addf %3, %5 : vector<16x256xf32>
    %cst_5 = arith.constant 0.000000e+00 : f32
    %7 = vector.broadcast %cst_5 : f32 to vector<16x256xf32>
    %8 = arith.maximumf %6, %7 : vector<16x256xf32>
    %9 = arith.truncf %8 : vector<16x256xf32> to vector<16x256xbf16>
    %c0_6 = arith.constant 0 : index
    %c0_7 = arith.constant 0 : index
    %10 = vector.load %arg5[%c0_6, %c0_7] : memref<16x256xbf16, #tpu.memory_space<vmem>>, vector<16x256xbf16>
    tpu.vector_store %arg5[%c0_6, %c0_7], %9 {strides = array<i32>} : memref<16x256xbf16, #tpu.memory_space<vmem>>, vector<16x256xbf16>,
    return
  }
  func.func @transform_0(%arg0: i32, %arg1: i32) -> (i32, i32) {
    %c0_i32 = arith.constant 0 : i32
    %c0_i32_0 = arith.constant 0 : i32
    return %arg0, %c0_i32 : i32, i32
  }
  func.func @transform_1(%arg0: i32, %arg1: i32) -> (i32, i32) {
    %c0_i32 = arith.constant 0 : i32
    %c0_i32_0 = arith.constant 0 : i32
    return %arg1, %c0_i32 : i32, i32
  }
  func.func @transform_2(%arg0: i32, %arg1: i32) -> (i32, i32) {
    %c0_i32 = arith.constant 0 : i32
    %c0_i32_0 = arith.constant 0 : i32
    return %c0_i32, %arg1 : i32, i32
  }
  func.func @transform_3(%arg0: i32, %arg1: i32) -> (i32, i32) {
    %c0_i32 = arith.constant 0 : i32
    return %arg0, %arg1 : i32, i32
  }
}

module attributes {stable_mosaic.version = 11 : i64} {
  func.func @_add_layernorm_kernel(%arg0: i32, %arg1: memref<16x128xf32, #tpu.memory_space<vmem>>, %arg2: memref<16x128xf32, #tpu.memory_space<vmem>>, %arg3: memref<1x128xf32, #tpu.memory_space<vmem>>, %arg4: memref<1x128xf32, #tpu.memory_space<vmem>>, %arg5: memref<16x128xf32, #tpu.memory_space<vmem>>) attributes {dimension_semantics = [#tpu.dimension_semantics<parallel>], iteration_bounds = array<i64: 1>, scalar_prefetch = 0 : i64, scratch_operands = 0 : i64, tpu.core_type = #tpu.core_type<tc>, window_params = [{transform_indices = @transform_0, window_bounds = array<i64: 16, 128>}, {transform_indices = @transform_1, window_bounds = array<i64: 16, 128>}, {pipeline_mode = #tpu.pipeline_mode<synchronous>, transform_indices = @transform_2, window_bounds = array<i64: 1, 128>}, {pipeline_mode = #tpu.pipeline_mode<synchronous>, transform_indices = @transform_3, window_bounds = array<i64: 1, 128>}, {transform_indices = @transform_4, window_bounds = array<i64: 16, 128>}]} {
    %c0 = arith.constant 0 : index
    %c0_0 = arith.constant 0 : index
    %0 = vector.load %arg1[%c0, %c0_0] : memref<16x128xf32, #tpu.memory_space<vmem>>, vector<16x128xf32>
    %c0_1 = arith.constant 0 : index
    %c0_2 = arith.constant 0 : index
    %1 = vector.load %arg2[%c0_1, %c0_2] : memref<16x128xf32, #tpu.memory_space<vmem>>, vector<16x128xf32>
    %2 = arith.addf %0, %1 : vector<16x128xf32>
    %cst = arith.constant dense<0.000000e+00> : vector<16xf32>
    %3 = vector.multi_reduction <add>, %2, %cst [1] : vector<16x128xf32> to vector<16xf32>
    %4 = vector.shape_cast %3 : vector<16xf32> to vector<16x1xf32>
    %cst_3 = arith.constant 1.280000e+02 : f32
    %5 = vector.broadcast %cst_3 : f32 to vector<16x1xf32>
    %6 = arith.divf %4, %5 : vector<16x1xf32>
    %7 = vector.broadcast %6 : vector<16x1xf32> to vector<16x128xf32>
    %8 = arith.subf %2, %7 : vector<16x128xf32>
    %9 = arith.mulf %8, %8 : vector<16x128xf32>
    %cst_4 = arith.constant dense<0.000000e+00> : vector<16xf32>
    %10 = vector.multi_reduction <add>, %9, %cst_4 [1] : vector<16x128xf32> to vector<16xf32>
    %11 = vector.shape_cast %10 : vector<16xf32> to vector<16x1xf32>
    %cst_5 = arith.constant 1.280000e+02 : f32
    %12 = vector.broadcast %cst_5 : f32 to vector<16x1xf32>
    %13 = arith.divf %11, %12 : vector<16x1xf32>
    %cst_6 = arith.constant 9.99999974E-6 : f32
    %14 = vector.broadcast %cst_6 : f32 to vector<16x1xf32>
    %15 = arith.addf %13, %14 : vector<16x1xf32>
    %16 = math.rsqrt %15 : vector<16x1xf32>
    %17 = vector.broadcast %16 : vector<16x1xf32> to vector<16x128xf32>
    %18 = arith.mulf %8, %17 : vector<16x128xf32>
    %c0_7 = arith.constant 0 : index
    %c0_8 = arith.constant 0 : index
    %19 = vector.load %arg3[%c0_7, %c0_8] : memref<1x128xf32, #tpu.memory_space<vmem>>, vector<1x128xf32>
    %20 = vector.broadcast %19 : vector<1x128xf32> to vector<16x128xf32>
    %21 = arith.mulf %18, %20 : vector<16x128xf32>
    %c0_9 = arith.constant 0 : index
    %c0_10 = arith.constant 0 : index
    %22 = vector.load %arg4[%c0_9, %c0_10] : memref<1x128xf32, #tpu.memory_space<vmem>>, vector<1x128xf32>
    %23 = vector.broadcast %22 : vector<1x128xf32> to vector<16x128xf32>
    %24 = arith.addf %21, %23 : vector<16x128xf32>
    %c0_11 = arith.constant 0 : index
    %c0_12 = arith.constant 0 : index
    %25 = vector.load %arg5[%c0_11, %c0_12] : memref<16x128xf32, #tpu.memory_space<vmem>>, vector<16x128xf32>
    tpu.vector_store %arg5[%c0_11, %c0_12], %24 {strides = array<i32>} : memref<16x128xf32, #tpu.memory_space<vmem>>, vector<16x128xf32>,
    return
  }
  func.func @transform_0(%arg0: i32) -> (i32, i32) {
    %c0_i32 = arith.constant 0 : i32
    %c0_i32_0 = arith.constant 0 : i32
    return %arg0, %c0_i32 : i32, i32
  }
  func.func @transform_1(%arg0: i32) -> (i32, i32) {
    %c0_i32 = arith.constant 0 : i32
    %c0_i32_0 = arith.constant 0 : i32
    return %arg0, %c0_i32 : i32, i32
  }
  func.func @transform_2(%arg0: i32) -> (i32, i32) {
    %c0_i32 = arith.constant 0 : i32
    %c0_i32_0 = arith.constant 0 : i32
    %c0_i32_1 = arith.constant 0 : i32
    return %c0_i32, %c0_i32_0 : i32, i32
  }
  func.func @transform_3(%arg0: i32) -> (i32, i32) {
    %c0_i32 = arith.constant 0 : i32
    %c0_i32_0 = arith.constant 0 : i32
    %c0_i32_1 = arith.constant 0 : i32
    return %c0_i32, %c0_i32_0 : i32, i32
  }
  func.func @transform_4(%arg0: i32) -> (i32, i32) {
    %c0_i32 = arith.constant 0 : i32
    %c0_i32_0 = arith.constant 0 : i32
    return %arg0, %c0_i32 : i32, i32
  }
}

module attributes {stable_mosaic.version = 11 : i64} {
  func.func @_linear_kernel(%arg0: i32, %arg1: i32, %arg2: memref<16x256xbf16, #tpu.memory_space<vmem>>, %arg3: memref<128x256xbf16, #tpu.memory_space<vmem>>, %arg4: memref<1x128xf32, #tpu.memory_space<vmem>>, %arg5: memref<16x128xf32, #tpu.memory_space<vmem>>) attributes {dimension_semantics = [#tpu.dimension_semantics<parallel>, #tpu.dimension_semantics<parallel>], iteration_bounds = array<i64: 1, 1>, scalar_prefetch = 0 : i64, scratch_operands = 0 : i64, tpu.core_type = #tpu.core_type<tc>, window_params = [{transform_indices = @transform_0, window_bounds = array<i64: 16, 256>}, {transform_indices = @transform_1, window_bounds = array<i64: 128, 256>}, {transform_indices = @transform_2, window_bounds = array<i64: 1, 128>}, {transform_indices = @transform_3, window_bounds = array<i64: 16, 128>}]} {
    %c0 = arith.constant 0 : index
    %c0_0 = arith.constant 0 : index
    %0 = vector.load %arg2[%c0, %c0_0] : memref<16x256xbf16, #tpu.memory_space<vmem>>, vector<16x256xbf16>
    %c0_1 = arith.constant 0 : index
    %c0_2 = arith.constant 0 : index
    %1 = vector.load %arg3[%c0_1, %c0_2] : memref<128x256xbf16, #tpu.memory_space<vmem>>, vector<128x256xbf16>
    %cst = arith.constant dense<0.000000e+00> : vector<16x128xf32>
    %2 = tpu.matmul %0, %1, %cst {dimension_numbers = #tpu.dot_dimension_numbers<[1], [1], [0], [0], [0, 0, 1, 0], [], []>} : vector<16x256xbf16>, vector<128x256xbf16>, vector<16x128xf32> -> vector<16x128xf32>
    %c0_3 = arith.constant 0 : index
    %c0_4 = arith.constant 0 : index
    %3 = vector.load %arg4[%c0_3, %c0_4] : memref<1x128xf32, #tpu.memory_space<vmem>>, vector<1x128xf32>
    %4 = vector.broadcast %3 : vector<1x128xf32> to vector<16x128xf32>
    %5 = arith.addf %2, %4 : vector<16x128xf32>
    %c0_5 = arith.constant 0 : index
    %c0_6 = arith.constant 0 : index
    %6 = vector.load %arg5[%c0_5, %c0_6] : memref<16x128xf32, #tpu.memory_space<vmem>>, vector<16x128xf32>
    tpu.vector_store %arg5[%c0_5, %c0_6], %5 {strides = array<i32>} : memref<16x128xf32, #tpu.memory_space<vmem>>, vector<16x128xf32>,
    return
  }
  func.func @transform_0(%arg0: i32, %arg1: i32) -> (i32, i32) {
    %c0_i32 = arith.constant 0 : i32
    %c0_i32_0 = arith.constant 0 : i32
    return %arg0, %c0_i32 : i32, i32
  }
  func.func @transform_1(%arg0: i32, %arg1: i32) -> (i32, i32) {
    %c0_i32 = arith.constant 0 : i32
    %c0_i32_0 = arith.constant 0 : i32
    return %arg1, %c0_i32 : i32, i32
  }
  func.func @transform_2(%arg0: i32, %arg1: i32) -> (i32, i32) {
    %c0_i32 = arith.constant 0 : i32
    %c0_i32_0 = arith.constant 0 : i32
    return %c0_i32, %arg1 : i32, i32
  }
  func.func @transform_3(%arg0: i32, %arg1: i32) -> (i32, i32) {
    %c0_i32 = arith.constant 0 : i32
    return %arg0, %arg1 : i32, i32
  }
}

</mosaic_0001>

<llo_original>
// kernel: _lambda_.17
$region0: #{_lambda_.17}
  #allocation0 [shape = 'u32[]', space=smem, size = 0x4, offset = 0x4, fixed_abs, tag = 'smem constant byte address 0x4 - core index']
  #allocation1 [shape = 'u32[144,128]{1,0:T(1,128)}', space=vmem, size = 0x12000, scoped, tag = 'internal scratch']
  %s0 = inlined_call_operand.vmem [shape: f32[16,128], index: 0, kind: input, shape index: {}]
  %s1 = inlined_call_operand.vmem [shape: f32[16,128], index: 1, kind: input, shape index: {}]
  %s2 = inlined_call_operand.vmem [shape: f32[1,128], index: 2, kind: input, shape index: {}]
  %s3 = inlined_call_operand.vmem [shape: f32[1,128], index: 3, kind: input, shape index: {}]
  %s4 = inlined_call_operand.vmem [shape: f32[16,128], index: 4, kind: output, shape index: {}]
  %s5 = sld [smem:[#allocation0]]
  $region26: #{_lambda_.17} parent=0
    _
  %s7 = ssub.s32 1, %s5
  %s8 = scalar_select 0, %s7, %s5
  // Predicated region
  $region2: #{_lambda_.17} parent=0 // pred_check
    _
  $region3: #{_lambda_.17} parent=0 // pred_check_branch
    %10 = sbr.rel (0) target = $region5
  $region4: #{_lambda_.17} parent=0 // pred_region
    _
  $region5: #{_lambda_.17} parent=0 // pred_fallthru
    _
  // Predicated region
  $region6: #{_lambda_.17} parent=0 // pred_check
    _
  $region7: #{_lambda_.17} parent=0 // pred_check_branch
    %12 = sbr.rel (0) target = $region9
  $region8: #{_lambda_.17} parent=0 // pred_region
    _
  $region9: #{_lambda_.17} parent=0 // pred_fallthru
    _
  // Predicated region
  $region10: #{_lambda_.17} parent=0 // pred_check
    _
  $region11: #{_lambda_.17} parent=0 // pred_check_branch
    %14 = sbr.rel (0) target = $region13
  $region12: #{_lambda_.17} parent=0 // pred_region
    _
  $region13: #{_lambda_.17} parent=0 // pred_fallthru
    _
  // Predicated region
  $region14: #{_lambda_.17} parent=0 // pred_check
    _
  $region15: #{_lambda_.17} parent=0 // pred_check_branch
    %16 = sbr.rel (0) target = $region17
  $region16: #{_lambda_.17} parent=0 // pred_region
    _
  $region17: #{_lambda_.17} parent=0 // pred_fallthru
    _
  %v17 = vld [vmem:[%s0] sm:$0xff]
  %v18 = vld [vmem:[%s0 + $0x8] sm:$0xff]
  %v19 = vld [vmem:[%s1] sm:$0xff]
  %v20 = vld [vmem:[%s1 + $0x8] sm:$0xff]
  %v21 = vadd.f32 %v17, %v19
  %v22 = vadd.f32 %v18, %v20
  %23 = vadd.xlane.f32.xlu0 %v21
  %v24 = vpop.xlane.xlu0 %23
  %25 = vadd.xlane.f32.xlu0 %v22
  %v26 = vpop.xlane.xlu0 %25
  %v27 = vrcp.pop 128.0
  %v28 = vmul.f32 %v24, %v27
  %v29 = vmul.f32 %v26, %v27
  %v30 = vsub.f32 %v21, %v28
  %v31 = vsub.f32 %v22, %v29
  %v32 = vmul.f32 %v30, %v30
  %v33 = vmul.f32 %v31, %v31
  %34 = vadd.xlane.f32.xlu0 %v32
  %v35 = vpop.xlane.xlu0 %34
  %36 = vadd.xlane.f32.xlu0 %v33
  %v37 = vpop.xlane.xlu0 %36
  %v38 = vmul.f32 %v35, %v27
  %v39 = vmul.f32 %v37, %v27
  %v40 = vadd.f32 %v38, 1e-05
  %v41 = vadd.f32 %v39, 1e-05
  %v42 = vrsqrt.pop %v40
  %v43 = vrsqrt.pop %v41
  %v44 = vmul.f32 %v30, %v42
  %v45 = vmul.f32 %v31, %v43
  %v46 = vld [vmem:[%s2] sm:$0x1]
  %v48 = vlaneseq
  %v49 = vshrl.u32 %v48, 7
  %v50 = vsub.s32 0, %v49
  %v51 = vrot.slane %v46, %v50
  %v53 = vmul.f32 %v44, %v51
  %v54 = vmul.f32 %v45, %v51
  %v55 = vld [vmem:[%s3] sm:$0x1]
  %v57 = vlaneseq
  %v58 = vshrl.u32 %v57, 7
  %v59 = vsub.s32 0, %v58
  %v60 = vrot.slane %v55, %v59
  %v62 = vadd.f32 %v53, %v60
  %v63 = vadd.f32 %v54, %v60
  %64 = vst [vmem:[%s4] sm:$0xff] %v62
  %65 = vst [vmem:[%s4 + $0x8] sm:$0xff] %v63
  // Predicated region
  $region18: #{_lambda_.17} parent=0 // pred_check
    _
  $region19: #{_lambda_.17} parent=0 // pred_check_branch
    %67 = sbr.rel (0) target = $region21
  $region20: #{_lambda_.17} parent=0 // pred_region
    _
  $region21: #{_lambda_.17} parent=0 // pred_fallthru
    _
  // Predicated region
  $region22: #{_lambda_.17} parent=0 // pred_check
    _
  $region23: #{_lambda_.17} parent=0 // pred_check_branch
    %69 = sbr.rel (0) target = $region25
  $region24: #{_lambda_.17} parent=0 // pred_region
    _
  $region25: #{_lambda_.17} parent=0 // pred_fallthru
    _

// kernel: _lambda_.16
$region0: #{_lambda_.16}
  #allocation0 [shape = 'u32[]', space=smem, size = 0x4, offset = 0x4, fixed_abs, tag = 'smem constant byte address 0x4 - core index']
  #allocation1 [shape = 'u32[144,128]{1,0:T(1,128)}', space=vmem, size = 0x12000, scoped, tag = 'internal scratch']
  %s0 = inlined_call_operand.vmem [shape: bf16[16,128], index: 0, kind: input, shape index: {}]
  %s1 = inlined_call_operand.vmem [shape: bf16[128,128], index: 1, kind: input, shape index: {}]
  %s2 = inlined_call_operand.vmem [shape: f32[1,128], index: 2, kind: input, shape index: {}]
  %s3 = inlined_call_operand.vmem [shape: f32[16,128], index: 3, kind: output, shape index: {}]
  %s4 = sld [smem:[#allocation0]]
  $region22: #{_lambda_.16} parent=0
    _
  %s6 = ssub.s32 1, %s4
  %s7 = scalar_select 0, %s6, %s4
  // Predicated region
  $region2: #{_lambda_.16} parent=0 // pred_check
    _
  $region3: #{_lambda_.16} parent=0 // pred_check_branch
    %9 = sbr.rel (0) target = $region5
  $region4: #{_lambda_.16} parent=0 // pred_region
    _
  $region5: #{_lambda_.16} parent=0 // pred_fallthru
    _
  // Predicated region
  $region6: #{_lambda_.16} parent=0 // pred_check
    _
  $region7: #{_lambda_.16} parent=0 // pred_check_branch
    %11 = sbr.rel (0) target = $region9
  $region8: #{_lambda_.16} parent=0 // pred_region
    _
  $region9: #{_lambda_.16} parent=0 // pred_fallthru
    _
  // Predicated region
  $region10: #{_lambda_.16} parent=0 // pred_check
    _
  $region11: #{_lambda_.16} parent=0 // pred_check_branch
    %13 = sbr.rel (0) target = $region13
  $region12: #{_lambda_.16} parent=0 // pred_region
    _
  $region13: #{_lambda_.16} parent=0 // pred_fallthru
    _
  %v15 = vld [vmem:[%s0] sm:$0xf]
  %v16 = vld [vmem:[%s0 + $0x4] sm:$0xf]
  %v17 = vld [vmem:[%s1] sm:$0xf]
  %v18 = vld [vmem:[%s1 + $0x4] sm:$0xf]
  %v19 = vld [vmem:[%s1 + $0x8] sm:$0xf]
  %v20 = vld [vmem:[%s1 + $0xc] sm:$0xf]
  %v21 = vld [vmem:[%s1 + $0x10] sm:$0xf]
  %v22 = vld [vmem:[%s1 + $0x14] sm:$0xf]
  %v23 = vld [vmem:[%s1 + $0x18] sm:$0xf]
  %v24 = vld [vmem:[%s1 + $0x1c] sm:$0xf]
  %v25 = vld [vmem:[%s1 + $0x20] sm:$0xf]
  %v26 = vld [vmem:[%s1 + $0x24] sm:$0xf]
  %v27 = vld [vmem:[%s1 + $0x28] sm:$0xf]
  %v28 = vld [vmem:[%s1 + $0x2c] sm:$0xf]
  %v29 = vld [vmem:[%s1 + $0x30] sm:$0xf]
  %v30 = vld [vmem:[%s1 + $0x34] sm:$0xf]
  %v31 = vld [vmem:[%s1 + $0x38] sm:$0xf]
  %v32 = vld [vmem:[%s1 + $0x3c] sm:$0xf]
  %v33 = vld [vmem:[%s2] sm:$0x1]
  %v35 = vlaneseq
  %v36 = vshrl.u32 %v35, 7
  %v37 = vsub.s32 0, %v36
  %v38 = vrot.slane %v33, %v37
  %v42 = vunpack.c.l.b16 %v15
  %v43 = vunpack.c.l.b16 %v16
  %v44 = vpack.c.b16 %v43, %v42
  %v62 = vunpack.c.l.b16 %v17
  %v63 = vunpack.c.l.b16 %v18
  %v64 = vunpack.c.l.b16 %v19
  %v65 = vunpack.c.l.b16 %v20
  %v66 = vunpack.c.l.b16 %v21
  %v67 = vunpack.c.l.b16 %v22
  %v68 = vunpack.c.l.b16 %v23
  %v69 = vunpack.c.l.b16 %v24
  %v70 = vunpack.c.l.b16 %v25
  %v71 = vunpack.c.l.b16 %v26
  %v72 = vunpack.c.l.b16 %v27
  %v73 = vunpack.c.l.b16 %v28
  %v74 = vunpack.c.l.b16 %v29
  %v75 = vunpack.c.l.b16 %v30
  %v76 = vunpack.c.l.b16 %v31
  %v77 = vunpack.c.l.b16 %v32
  %v78 = vpack.c.b16 %v63, %v62
  %v79 = vpack.c.b16 %v65, %v64
  %v80 = vpack.c.b16 %v67, %v66
  %v81 = vpack.c.b16 %v69, %v68
  %v82 = vpack.c.b16 %v71, %v70
  %v83 = vpack.c.b16 %v73, %v72
  %v84 = vpack.c.b16 %v75, %v74
  %v85 = vpack.c.b16 %v77, %v76
  %94 = vmatprep.subr.bf16.mxu0 0
  %95 = vmatpush1.bf16.xpose.msra.mxu0 %v78
  %96 = vmatprep.subr.bf16.mxu0 0
  %97 = vmatpush1.bf16.xpose.msra.mxu0 %v79
  %98 = vmatprep.subr.bf16.mxu0 0
  %99 = vmatpush1.bf16.xpose.msra.mxu0 %v80
  %100 = vmatprep.subr.bf16.mxu0 0
  %101 = vmatpush1.bf16.xpose.msra.mxu0 %v81
  %102 = vmatprep.subr.bf16.mxu0 0
  %103 = vmatpush1.bf16.xpose.msra.mxu0 %v82
  %104 = vmatprep.subr.bf16.mxu0 0
  %105 = vmatpush1.bf16.xpose.msra.mxu0 %v83
  %106 = vmatprep.subr.bf16.mxu0 0
  %107 = vmatpush1.bf16.xpose.msra.mxu0 %v84
  %108 = vmatprep.subr.bf16.mxu0 0
  %109 = vmatpush1.bf16.xpose.msra.mxu0 %v85
  %110 = vmatprep.subr.bf16.mxu0 0
  %111 = vmatpush1.bf16.xpose.msra.mxu0 0
  %112 = vmatprep.subr.bf16.mxu0 0
  %113 = vmatpush1.bf16.xpose.msra.mxu0 0
  %114 = vmatprep.subr.bf16.mxu0 0
  %115 = vmatpush1.bf16.xpose.msra.mxu0 0
  %116 = vmatprep.subr.bf16.mxu0 0
  %117 = vmatpush1.bf16.xpose.msra.mxu0 0
  %118 = vmatprep.subr.bf16.mxu0 0
  %119 = vmatpush1.bf16.xpose.msra.mxu0 0
  %120 = vmatprep.subr.bf16.mxu0 0
  %121 = vmatpush1.bf16.xpose.msra.mxu0 0
  %122 = vmatprep.subr.bf16.mxu0 0
  %123 = vmatpush1.bf16.xpose.msra.mxu0 0
  %124 = vmatprep.subr.bf16.mxu0 0
  %125 = vmatpush1.bf16.xpose.msra.mxu0 0
  %126 = vmatprep.mubr.bf16.mxu0 0
  %127 = vmatmul.mubr.bf16.gmra.mrb[0].mxu0 %v44
  %v128 = vpop.f32.mrb[0].mxu0
  %v129 = vadd.f32 %v38, %v128
  %v130 = vpop.f32.mrb[0].mxu0
  %v131 = vpop.f32.mrb[0].mxu0
  %v132 = vadd.f32 %v38, %v131
  %v133 = vpop.f32.mrb[0].mxu0
  %134 = vdwg.mxu0
  %135 = vst [vmem:[%s3] sm:$0xff] %v129
  %136 = vst [vmem:[%s3 + $0x8] sm:$0xff] %v132
  // Predicated region
  $region14: #{_lambda_.16} parent=0 // pred_check
    _
  $region15: #{_lambda_.16} parent=0 // pred_check_branch
    %138 = sbr.rel (0) target = $region17
  $region16: #{_lambda_.16} parent=0 // pred_region
    _
  $region17: #{_lambda_.16} parent=0 // pred_fallthru
    _
  // Predicated region
  $region18: #{_lambda_.16} parent=0 // pred_check
    _
  $region19: #{_lambda_.16} parent=0 // pred_check_branch
    %140 = sbr.rel (0) target = $region21
  $region20: #{_lambda_.16} parent=0 // pred_region
    _
  $region21: #{_lambda_.16} parent=0 // pred_fallthru
    _

// kernel: _lambda_.14
$region0: #{_lambda_.14}
  #allocation0 [shape = 'u32[]', space=smem, size = 0x4, offset = 0x4, fixed_abs, tag = 'smem constant byte address 0x4 - core index']
  #allocation1 [shape = 'u32[144,128]{1,0:T(1,128)}', space=vmem, size = 0x12000, scoped, tag = 'internal scratch']
  %s0 = inlined_call_operand.vmem [shape: f32[16,128], index: 0, kind: input, shape index: {}]
  %s1 = inlined_call_operand.vmem [shape: bf16[384,128], index: 1, kind: input, shape index: {}]
  %s2 = inlined_call_operand.vmem [shape: f32[1,384], index: 2, kind: input, shape index: {}]
  %s3 = inlined_call_operand.vmem [shape: bf16[16,384], index: 3, kind: output, shape index: {}]
  %s4 = sld [smem:[#allocation0]]
  $region22: #{_lambda_.14} parent=0
    _
  %s6 = ssub.s32 1, %s4
  %s7 = scalar_select 0, %s6, %s4
  // Predicated region
  $region2: #{_lambda_.14} parent=0 // pred_check
    _
  $region3: #{_lambda_.14} parent=0 // pred_check_branch
    %9 = sbr.rel (0) target = $region5
  $region4: #{_lambda_.14} parent=0 // pred_region
    _
  $region5: #{_lambda_.14} parent=0 // pred_fallthru
    _
  // Predicated region
  $region6: #{_lambda_.14} parent=0 // pred_check
    _
  $region7: #{_lambda_.14} parent=0 // pred_check_branch
    %11 = sbr.rel (0) target = $region9
  $region8: #{_lambda_.14} parent=0 // pred_region
    _
  $region9: #{_lambda_.14} parent=0 // pred_fallthru
    _
  // Predicated region
  $region10: #{_lambda_.14} parent=0 // pred_check
    _
  $region11: #{_lambda_.14} parent=0 // pred_check_branch
    %13 = sbr.rel (0) target = $region13
  $region12: #{_lambda_.14} parent=0 // pred_region
    _
  $region13: #{_lambda_.14} parent=0 // pred_fallthru
    _
  %v15 = vld [vmem:[%s0] sm:$0xff]
  %v16 = vld [vmem:[%s0 + $0x8] sm:$0xff]
  %v17 = vpack.c.bf16 %v16, %v15
  %v18 = vld [vmem:[%s1] sm:$0xf]
  %v19 = vld [vmem:[%s1 + $0x4] sm:$0xf]
  %v20 = vld [vmem:[%s1 + $0x8] sm:$0xf]
  %v21 = vld [vmem:[%s1 + $0xc] sm:$0xf]
  %v22 = vld [vmem:[%s1 + $0x10] sm:$0xf]
  %v23 = vld [vmem:[%s1 + $0x14] sm:$0xf]
  %v24 = vld [vmem:[%s1 + $0x18] sm:$0xf]
  %v25 = vld [vmem:[%s1 + $0x1c] sm:$0xf]
  %v26 = vld [vmem:[%s1 + $0x20] sm:$0xf]
  %v27 = vld [vmem:[%s1 + $0x24] sm:$0xf]
  %v28 = vld [vmem:[%s1 + $0x28] sm:$0xf]
  %v29 = vld [vmem:[%s1 + $0x2c] sm:$0xf]
  %v30 = vld [vmem:[%s1 + $0x30] sm:$0xf]
  %v31 = vld [vmem:[%s1 + $0x34] sm:$0xf]
  %v32 = vld [vmem:[%s1 + $0x38] sm:$0xf]
  %v33 = vld [vmem:[%s1 + $0x3c] sm:$0xf]
  %v34 = vld [vmem:[%s1 + $0x40] sm:$0xf]
  %v35 = vld [vmem:[%s1 + $0x44] sm:$0xf]
  %v36 = vld [vmem:[%s1 + $0x48] sm:$0xf]
  %v37 = vld [vmem:[%s1 + $0x4c] sm:$0xf]
  %v38 = vld [vmem:[%s1 + $0x50] sm:$0xf]
  %v39 = vld [vmem:[%s1 + $0x54] sm:$0xf]
  %v40 = vld [vmem:[%s1 + $0x58] sm:$0xf]
  %v41 = vld [vmem:[%s1 + $0x5c] sm:$0xf]
  %v42 = vld [vmem:[%s1 + $0x60] sm:$0xf]
  %v43 = vld [vmem:[%s1 + $0x64] sm:$0xf]
  %v44 = vld [vmem:[%s1 + $0x68] sm:$0xf]
  %v45 = vld [vmem:[%s1 + $0x6c] sm:$0xf]
  %v46 = vld [vmem:[%s1 + $0x70] sm:$0xf]
  %v47 = vld [vmem:[%s1 + $0x74] sm:$0xf]
  %v48 = vld [vmem:[%s1 + $0x78] sm:$0xf]
  %v49 = vld [vmem:[%s1 + $0x7c] sm:$0xf]
  %v50 = vld [vmem:[%s1 + $0x80] sm:$0xf]
  %v51 = vld [vmem:[%s1 + $0x84] sm:$0xf]
  %v52 = vld [vmem:[%s1 + $0x88] sm:$0xf]
  %v53 = vld [vmem:[%s1 + $0x8c] sm:$0xf]
  %v54 = vld [vmem:[%s1 + $0x90] sm:$0xf]
  %v55 = vld [vmem:[%s1 + $0x94] sm:$0xf]
  %v56 = vld [vmem:[%s1 + $0x98] sm:$0xf]
  %v57 = vld [vmem:[%s1 + $0x9c] sm:$0xf]
  %v58 = vld [vmem:[%s1 + $0xa0] sm:$0xf]
  %v59 = vld [vmem:[%s1 + $0xa4] sm:$0xf]
  %v60 = vld [vmem:[%s1 + $0xa8] sm:$0xf]
  %v61 = vld [vmem:[%s1 + $0xac] sm:$0xf]
  %v62 = vld [vmem:[%s1 + $0xb0] sm:$0xf]
  %v63 = vld [vmem:[%s1 + $0xb4] sm:$0xf]
  %v64 = vld [vmem:[%s1 + $0xb8] sm:$0xf]
  %v65 = vld [vmem:[%s1 + $0xbc] sm:$0xf]
  %v66 = vld [vmem:[%s2] sm:$0x7]
  %v68 = vlaneseq
  %v69 = vshrl.u32 %v68, 7
  %v70 = vsub.s32 0, %v69
  %v71 = vrot.slane %v66, %v70
  %v72 = vlaneseq
  %v73 = vshrl.u32 %v72, 7
  %v74 = vsub.s32 1, %v73
  %v75 = vrot.slane %v66, %v74
  %v76 = vlaneseq
  %v77 = vshrl.u32 %v76, 7
  %v78 = vsub.s32 2, %v77
  %v79 = vrot.slane %v66, %v78
  %v131 = vunpack.c.l.b16 %v18
  %v132 = vunpack.c.l.b16 %v19
  %v133 = vunpack.c.l.b16 %v20
  %v134 = vunpack.c.l.b16 %v21
  %v135 = vunpack.c.l.b16 %v22
  %v136 = vunpack.c.l.b16 %v23
  %v137 = vunpack.c.l.b16 %v24
  %v138 = vunpack.c.l.b16 %v25
  %v139 = vunpack.c.l.b16 %v26
  %v140 = vunpack.c.l.b16 %v27
  %v141 = vunpack.c.l.b16 %v28
  %v142 = vunpack.c.l.b16 %v29
  %v143 = vunpack.c.l.b16 %v30
  %v144 = vunpack.c.l.b16 %v31
  %v145 = vunpack.c.l.b16 %v32
  %v146 = vunpack.c.l.b16 %v33
  %v147 = vunpack.c.l.b16 %v34
  %v148 = vunpack.c.l.b16 %v35
  %v149 = vunpack.c.l.b16 %v36
  %v150 = vunpack.c.l.b16 %v37
  %v151 = vunpack.c.l.b16 %v38
  %v152 = vunpack.c.l.b16 %v39
  %v153 = vunpack.c.l.b16 %v40
  %v154 = vunpack.c.l.b16 %v41
  %v155 = vunpack.c.l.b16 %v42
  %v156 = vunpack.c.l.b16 %v43
  %v157 = vunpack.c.l.b16 %v44
  %v158 = vunpack.c.l.b16 %v45
  %v159 = vunpack.c.l.b16 %v46
  %v160 = vunpack.c.l.b16 %v47
  %v161 = vunpack.c.l.b16 %v48
  %v162 = vunpack.c.l.b16 %v49
  %v163 = vunpack.c.l.b16 %v50
  %v164 = vunpack.c.l.b16 %v51
  %v165 = vunpack.c.l.b16 %v52
  %v166 = vunpack.c.l.b16 %v53
  %v167 = vunpack.c.l.b16 %v54
  %v168 = vunpack.c.l.b16 %v55
  %v169 = vunpack.c.l.b16 %v56
  %v170 = vunpack.c.l.b16 %v57
  %v171 = vunpack.c.l.b16 %v58
  %v172 = vunpack.c.l.b16 %v59
  %v173 = vunpack.c.l.b16 %v60
  %v174 = vunpack.c.l.b16 %v61
  %v175 = vunpack.c.l.b16 %v62
  %v176 = vunpack.c.l.b16 %v63
  %v177 = vunpack.c.l.b16 %v64
  %v178 = vunpack.c.l.b16 %v65
  %v179 = vpack.c.b16 %v132, %v131
  %v180 = vpack.c.b16 %v134, %v133
  %v181 = vpack.c.b16 %v136, %v135
  %v182 = vpack.c.b16 %v138, %v137
  %v183 = vpack.c.b16 %v140, %v139
  %v184 = vpack.c.b16 %v142, %v141
  %v185 = vpack.c.b16 %v144, %v143
  %v186 = vpack.c.b16 %v146, %v145
  %v187 = vpack.c.b16 %v148, %v147
  %v188 = vpack.c.b16 %v150, %v149
  %v189 = vpack.c.b16 %v152, %v151
  %v190 = vpack.c.b16 %v154, %v153
  %v191 = vpack.c.b16 %v156, %v155
  %v192 = vpack.c.b16 %v158, %v157
  %v193 = vpack.c.b16 %v160, %v159
  %v194 = vpack.c.b16 %v162, %v161
  %v195 = vpack.c.b16 %v164, %v163
  %v196 = vpack.c.b16 %v166, %v165
  %v197 = vpack.c.b16 %v168, %v167
  %v198 = vpack.c.b16 %v170, %v169
  %v199 = vpack.c.b16 %v172, %v171
  %v200 = vpack.c.b16 %v174, %v173
  %v201 = vpack.c.b16 %v176, %v175
  %v202 = vpack.c.b16 %v178, %v177
  %227 = vmatprep.subr.bf16.mxu0 0
  %228 = vmatpush1.bf16.xpose.msra.mxu0 %v179
  %229 = vmatprep.subr.bf16.mxu0 0
  %230 = vmatpush1.bf16.xpose.msra.mxu0 %v180
  %231 = vmatprep.subr.bf16.mxu0 0
  %232 = vmatpush1.bf16.xpose.msra.mxu0 %v181
  %233 = vmatprep.subr.bf16.mxu0 0
  %234 = vmatpush1.bf16.xpose.msra.mxu0 %v182
  %235 = vmatprep.subr.bf16.mxu0 0
  %236 = vmatpush1.bf16.xpose.msra.mxu0 %v183
  %237 = vmatprep.subr.bf16.mxu0 0
  %238 = vmatpush1.bf16.xpose.msra.mxu0 %v184
  %239 = vmatprep.subr.bf16.mxu0 0
  %240 = vmatpush1.bf16.xpose.msra.mxu0 %v185
  %241 = vmatprep.subr.bf16.mxu0 0
  %242 = vmatpush1.bf16.xpose.msra.mxu0 %v186
  %243 = vmatprep.subr.bf16.mxu0 0
  %244 = vmatpush1.bf16.xpose.msra.mxu0 %v187
  %245 = vmatprep.subr.bf16.mxu0 0
  %246 = vmatpush1.bf16.xpose.msra.mxu0 %v188
  %247 = vmatprep.subr.bf16.mxu0 0
  %248 = vmatpush1.bf16.xpose.msra.mxu0 %v189
  %249 = vmatprep.subr.bf16.mxu0 0
  %250 = vmatpush1.bf16.xpose.msra.mxu0 %v190
  %251 = vmatprep.subr.bf16.mxu0 0
  %252 = vmatpush1.bf16.xpose.msra.mxu0 %v191
  %253 = vmatprep.subr.bf16.mxu0 0
  %254 = vmatpush1.bf16.xpose.msra.mxu0 %v192
  %255 = vmatprep.subr.bf16.mxu0 0
  %256 = vmatpush1.bf16.xpose.msra.mxu0 %v193
  %257 = vmatprep.subr.bf16.mxu0 0
  %258 = vmatpush1.bf16.xpose.msra.mxu0 %v194
  %259 = vmatprep.mubr.bf16.mxu0 0
  %260 = vmatmul.mubr.bf16.gmra.mrb[0].mxu0 %v17
  %v261 = vpop.f32.mrb[0].mxu0
  %v262 = vadd.f32 %v71, %v261
  %v263 = vpop.f32.mrb[0].mxu0
  %v264 = vadd.f32 %v75, %v263
  %v265 = vpop.f32.mrb[0].mxu0
  %v266 = vadd.f32 %v71, %v265
  %v267 = vpop.f32.mrb[0].mxu0
  %v268 = vadd.f32 %v75, %v267
  %269 = vdwg.mxu0
  %270 = vmatprep.subr.bf16.mxu0 0
  %271 = vmatpush1.bf16.xpose.msra.mxu0 %v195
  %272 = vmatprep.subr.bf16.mxu0 0
  %273 = vmatpush1.bf16.xpose.msra.mxu0 %v196
  %274 = vmatprep.subr.bf16.mxu0 0
  %275 = vmatpush1.bf16.xpose.msra.mxu0 %v197
  %276 = vmatprep.subr.bf16.mxu0 0
  %277 = vmatpush1.bf16.xpose.msra.mxu0 %v198
  %278 = vmatprep.subr.bf16.mxu0 0
  %279 = vmatpush1.bf16.xpose.msra.mxu0 %v199
  %280 = vmatprep.subr.bf16.mxu0 0
  %281 = vmatpush1.bf16.xpose.msra.mxu0 %v200
  %282 = vmatprep.subr.bf16.mxu0 0
  %283 = vmatpush1.bf16.xpose.msra.mxu0 %v201
  %284 = vmatprep.subr.bf16.mxu0 0
  %285 = vmatpush1.bf16.xpose.msra.mxu0 %v202
  %286 = vmatprep.subr.bf16.mxu0 0
  %287 = vmatpush1.bf16.xpose.msra.mxu0 0
  %288 = vmatprep.subr.bf16.mxu0 0
  %289 = vmatpush1.bf16.xpose.msra.mxu0 0
  %290 = vmatprep.subr.bf16.mxu0 0
  %291 = vmatpush1.bf16.xpose.msra.mxu0 0
  %292 = vmatprep.subr.bf16.mxu0 0
  %293 = vmatpush1.bf16.xpose.msra.mxu0 0
  %294 = vmatprep.subr.bf16.mxu0 0
  %295 = vmatpush1.bf16.xpose.msra.mxu0 0
  %296 = vmatprep.subr.bf16.mxu0 0
  %297 = vmatpush1.bf16.xpose.msra.mxu0 0
  %298 = vmatprep.subr.bf16.mxu0 0
  %299 = vmatpush1.bf16.xpose.msra.mxu0 0
  %300 = vmatprep.subr.bf16.mxu0 0
  %301 = vmatpush1.bf16.xpose.msra.mxu0 0
  %302 = vmatprep.mubr.bf16.mxu0 0
  %303 = vmatmul.mubr.bf16.gmra.mrb[0].mxu0 %v17
  %v304 = vpop.f32.mrb[0].mxu0
  %v305 = vadd.f32 %v79, %v304
  %v306 = vpop.f32.mrb[0].mxu0
  %v307 = vpop.f32.mrb[0].mxu0
  %v308 = vadd.f32 %v79, %v307
  %v309 = vpop.f32.mrb[0].mxu0
  %310 = vdwg.mxu0
  %v311 = vpack.c.bf16 %v266, %v262
  %v312 = vpack.c.bf16 %v268, %v264
  %v313 = vpack.c.bf16 %v308, %v305
  %v317 = vunpack.c.l.b16 %v311
  %v318 = vunpack.c.l.b16 %v312
  %v319 = vunpack.c.l.b16 %v313
  %v320 = vunpack.c.h.b16 %v311
  %v321 = vunpack.c.h.b16 %v312
  %v322 = vunpack.c.h.b16 %v313
  %v323 = vpack.c.b16 %v318, %v317
  %v324 = vpack.c.b16 %v319, %v319
  %v325 = vpack.c.b16 %v321, %v320
  %v326 = vpack.c.b16 %v322, %v322
  %331 = vst [vmem:[%s3] sm:$0xff] %v323
  %332 = vst [vmem:[%s3 + $0x8] sm:$0xf] %v324
  %333 = vst [vmem:[%s3 + $0xc] sm:$0xff] %v325
  %334 = vst [vmem:[%s3 + $0x14] sm:$0xf] %v326
  // Predicated region
  $region14: #{_lambda_.14} parent=0 // pred_check
    _
  $region15: #{_lambda_.14} parent=0 // pred_check_branch
    %336 = sbr.rel (0) target = $region17
  $region16: #{_lambda_.14} parent=0 // pred_region
    _
  $region17: #{_lambda_.14} parent=0 // pred_fallthru
    _
  // Predicated region
  $region18: #{_lambda_.14} parent=0 // pred_check
    _
  $region19: #{_lambda_.14} parent=0 // pred_check_branch
    %338 = sbr.rel (0) target = $region21
  $region20: #{_lambda_.14} parent=0 // pred_region
    _
  $region21: #{_lambda_.14} parent=0 // pred_fallthru
    _

// kernel: _lambda_.15
$region0: #{_lambda_.15}
  #allocation0 [shape = 'u32[]', space=smem, size = 0x4, offset = 0x4, fixed_abs, tag = 'smem constant byte address 0x4 - core index']
  #allocation1 [shape = 'u32[144,128]{1,0:T(1,128)}', space=vmem, size = 0x12000, scoped, tag = 'internal scratch']
  %s0 = inlined_call_operand.vmem [shape: bf16[2,8,384], index: 0, kind: input, shape index: {}]
  %s1 = inlined_call_operand.vmem [shape: bf16[2,8,128], index: 1, kind: output, shape index: {}]
  %s2 = sld [smem:[#allocation0]]
  $region37: #{_lambda_.15} parent=0
    _
  %s4 = ssub.s32 1, %s2
  %s5 = scalar_select 0, %s4, %s2
  loop: start=0, step=1, limit=4
  $region2: #{_lambda_.15} parent=0 // loop_pre_header
    _
  $region3: #{_lambda_.15} parent=0 // loop_header
    %s7 = sphi 0, %s11
    %p8 = scmp.ge.s32.totalorder %s7, 4
    %s17 = sphi 0, %s19
    %s20 = sphi 0, %s17
    %s21 = sphi 0, %s20
    %s37 = sphi 0, %s21
    %s43 = sphi 0, %s45
    %s46 = sphi 0, %s43
    %s47 = sphi 0, %s46
    %s63 = sphi 0, %s47
  $region4: #{_lambda_.15} parent=0 // loop_header_branch
    %10 = sbr.rel (%p8) target = $region8
  $region5: #{_lambda_.15} parent=0 // loop_body
    %s12 = ssub.s32 %s7, 1
    %s13 = ssub.s32 %s7, 2
    %s14 = sadd.s32 %s7, 1
    %s15 = ssub.s32 %s7, %s14
    %p16 = scmp.eq.s32.totalorder %s15, 0
    %s18 = sadd.s32 %s17, 1
    %s19 = scalar_select %p16, %s17, %s18
    %p22 = pneg %p16
    %p23 = scmp.eq.s32.totalorder %s7, 1
    %p24 = por %p22, %p23
    %p25 = scmp.ne.s32.totalorder %s17, %s20
    %p26 = scmp.eq.s32.totalorder %s7, 0
    %p27 = por %p25, %p26
    %p28 = scmp.ne.s32.totalorder %s17, %s20
    %p29 = scmp.eq.s32.totalorder %s12, 1
    %p30 = por %p28, %p29
    %p31 = scmp.ne.s32.totalorder %s20, %s21
    %p32 = scmp.eq.s32.totalorder %s12, 0
    %p33 = por %p31, %p32
    %p34 = scmp.ne.s32.totalorder %s20, %s21
    %p35 = scmp.eq.s32.totalorder %s13, 1
    %p36 = por %p34, %p35
    %p38 = scmp.ne.s32.totalorder %s21, %s37
    %p39 = scmp.eq.s32.totalorder %s13, 0
    %p40 = por %p38, %p39
    %s41 = ssub.s32 %s7, %s14
    %p42 = scmp.eq.s32.totalorder %s41, 0
    %s44 = sadd.s32 %s43, 1
    %s45 = scalar_select %p42, %s43, %s44
    %p48 = pneg %p42
    %p49 = scmp.eq.s32.totalorder %s7, 1
    %p50 = por %p48, %p49
    %p51 = scmp.ne.s32.totalorder %s43, %s46
    %p52 = scmp.eq.s32.totalorder %s7, 0
    %p53 = por %p51, %p52
    %p54 = scmp.ne.s32.totalorder %s43, %s46
    %p55 = scmp.eq.s32.totalorder %s12, 1
    %p56 = por %p54, %p55
    %p57 = scmp.ne.s32.totalorder %s46, %s47
    %p58 = scmp.eq.s32.totalorder %s12, 0
    %p59 = por %p57, %p58
    %p60 = scmp.ne.s32.totalorder %s46, %s47
    %p61 = scmp.eq.s32.totalorder %s13, 1
    %p62 = por %p60, %p61
    %p64 = scmp.ne.s32.totalorder %s47, %s63
    %p65 = scmp.eq.s32.totalorder %s13, 0
    %p66 = por %p64, %p65
    %p67 = scmp.le.s32.totalorder 1, %s7
    %p68 = scmp.lt.s32.totalorder %s7, 3
    %p69 = pnand %p67, %p68
    %p70 = pneg %p69
    // Predicated region
    $region9: #{_lambda_.15} parent=5 // pred_check
      _
    $region10: #{_lambda_.15} parent=5 // pred_check_branch
      %72 = sbr.rel (%p69) target = $region12
    $region11: #{_lambda_.15} parent=5 // pred_region
      %s73 = ssub.s32 %s7, 1
    $region12: #{_lambda_.15} parent=5 // pred_fallthru
      _
    %p74 = scmp.lt.s32.totalorder %s7, 2
    // Predicated region
    $region13: #{_lambda_.15} parent=5 // pred_check
      %p75 = pneg %p74
    $region14: #{_lambda_.15} parent=5 // pred_check_branch
      %77 = sbr.rel (%p75) target = $region16
    $region15: #{_lambda_.15} parent=5 // pred_region
      // Predicated region
      $region17: #{_lambda_.15} parent=15 // pred_check
        %p78 = pneg %p27
      $region18: #{_lambda_.15} parent=15 // pred_check_branch
        %80 = sbr.rel (%p78) target = $region20
      $region19: #{_lambda_.15} parent=15 // pred_region
        %p81 = scmp.lt.s32.totalorder %s7, 1
        %s82 = scalar_select %p81, %s7, 1
        %s83 = smul.addr %s82, 3
        %s84 = smul.addr %s83, 4
        %s85 = scalar_lea.vmem %s0, %s84
      $region20: #{_lambda_.15} parent=15 // pred_fallthru
        _
    $region16: #{_lambda_.15} parent=5 // pred_fallthru
      _
    %p86 = scmp.le.s32.totalorder 1, %s7
    %p87 = scmp.lt.s32.totalorder %s7, 3
    %p88 = pnand %p86, %p87
    %p89 = pneg %p88
    // Predicated region
    $region21: #{_lambda_.15} parent=5 // pred_check
      _
    $region22: #{_lambda_.15} parent=5 // pred_check_branch
      %91 = sbr.rel (%p88) target = $region24
    $region23: #{_lambda_.15} parent=5 // pred_region
      %s92 = ssub.s32 %s7, 1
      %p93 = scmp.lt.s32.totalorder %s12, 1
      %s94 = scalar_select %p93, %s12, 1
      %s95 = smul.addr %s94, 3
      %s96 = smul.addr %s95, 4
      %s97 = scalar_lea.vmem %s0, %s96
      %p98 = pneg %p33
      %p99 = pneg %p30
      %p100 = pneg %p59
      %p101 = pneg %p56
      %p102 = scmp.lt.s32.totalorder %s12, 1
      %s103 = scalar_select %p102, %s12, 1
      %s104 = smul.addr %s103, 4
      %s105 = scalar_lea.vmem %s1, %s104
      %p106 = scmp.lt.s32.totalorder %s12, 1
      %s107 = scalar_select %p106, %s12, 1
      %s108 = smul.addr %s107, 3
      %s109 = smul.addr %s108, 4
      %s110 = scalar_lea.vmem %s0, %s109
      %p111 = scmp.lt.s32.totalorder %s12, 1
      %s112 = scalar_select %p111, %s12, 1
      %s113 = smul.addr %s112, 4
      %s114 = scalar_lea.vmem %s1, %s113
      %v116 = vld [vmem:[%s110] sm:$0xff]
      %v117 = vld [vmem:[%s110 + $0x8] sm:$0xf]
      %v119 = vunpack.c.h.b16 %v116
      %v120 = vpack.c.b16 %v119, %v119
      %vm121 = vcmask 261120
      %v123 = vsel %vm121, %v116, 0
      %v126 = vsel %vm121, %v120, 0
      %128 = vmatprep.subr.bf16.mxu0 0
      %129 = vmatpush1.bf16.xpose.msra.mxu0 %v126
      %130 = vmatprep.subr.bf16.mxu0 0
      %131 = vmatpush1.bf16.xpose.msra.mxu0 0
      %132 = vmatprep.subr.bf16.mxu0 0
      %133 = vmatpush1.bf16.xpose.msra.mxu0 0
      %134 = vmatprep.subr.bf16.mxu0 0
      %135 = vmatpush1.bf16.xpose.msra.mxu0 0
      %136 = vmatprep.subr.bf16.mxu0 0
      %137 = vmatpush1.bf16.xpose.msra.mxu0 0
      %138 = vmatprep.subr.bf16.mxu0 0
      %139 = vmatpush1.bf16.xpose.msra.mxu0 0
      %140 = vmatprep.subr.bf16.mxu0 0
      %141 = vmatpush1.bf16.xpose.msra.mxu0 0
      %142 = vmatprep.subr.bf16.mxu0 0
      %143 = vmatpush1.bf16.xpose.msra.mxu0 0
      %144 = vmatprep.subr.bf16.mxu0 0
      %145 = vmatpush1.bf16.xpose.msra.mxu0 0
      %146 = vmatprep.subr.bf16.mxu0 0
      %147 = vmatpush1.bf16.xpose.msra.mxu0 0
      %148 = vmatprep.subr.bf16.mxu0 0
      %149 = vmatpush1.bf16.xpose.msra.mxu0 0
      %150 = vmatprep.subr.bf16.mxu0 0
      %151 = vmatpush1.bf16.xpose.msra.mxu0 0
      %152 = vmatprep.subr.bf16.mxu0 0
      %153 = vmatpush1.bf16.xpose.msra.mxu0 0
      %154 = vmatprep.subr.bf16.mxu0 0
      %155 = vmatpush1.bf16.xpose.msra.mxu0 0
      %156 = vmatprep.subr.bf16.mxu0 0
      %157 = vmatpush1.bf16.xpose.msra.mxu0 0
      %158 = vmatprep.subr.bf16.mxu0 0
      %159 = vmatpush1.bf16.xpose.msra.mxu0 0
      %160 = vmatprep.mubr.bf16.mxu0 0
      %161 = vmatmul.mubr.bf16.gmra.mrb[0].mxu0 %v123
      %v162 = vpop.f32.mrb[0].mxu0
      %v163 = vadd.f32 0.0, %v162
      %v164 = vpop.f32.mrb[0].mxu0
      %v165 = vpop.f32.mrb[0].mxu0
      %v166 = vpop.f32.mrb[0].mxu0
      %167 = vdwg.mxu0
      %v168 = vmul.f32 %v163, 0.17677669
      %vm169 = vcmask 64512
      %v170 = vsel %vm169, %v168, -inf
      %171 = vmax.xlane.f32.xlu0 %v170
      %v172 = vpop.xlane.xlu0 %171
      %v173 = vsub.f32 %v168, %v172
      %v174 = vmul.f32 %v173, 1.442695
      %v175 = vpow.pop %v174
      %v176 = vsel %vm169, %v175, 0.0
      %177 = vadd.xlane.f32.xlu0 %v176
      %v178 = vpop.xlane.xlu0 %177
      %v179 = vpack.c.bf16 %v175, %v175
      %v181 = vsel %vm169, %v179, 0
      %vm183 = vcmask 1043456
      %v185 = vsel %vm183, %v117, 0
      %187 = vmatprep.subr.bf16.mxu0 0
      %188 = vmatpush1.bf16.msra.mxu0 %v185
      %189 = vmatprep.subr.bf16.mxu0 0
      %190 = vmatpush1.bf16.msra.mxu0 0
      %191 = vmatprep.subr.bf16.mxu0 0
      %192 = vmatpush1.bf16.msra.mxu0 0
      %193 = vmatprep.subr.bf16.mxu0 0
      %194 = vmatpush1.bf16.msra.mxu0 0
      %195 = vmatprep.subr.bf16.mxu0 0
      %196 = vmatpush1.bf16.msra.mxu0 0
      %197 = vmatprep.subr.bf16.mxu0 0
      %198 = vmatpush1.bf16.msra.mxu0 0
      %199 = vmatprep.subr.bf16.mxu0 0
      %200 = vmatpush1.bf16.msra.mxu0 0
      %201 = vmatprep.subr.bf16.mxu0 0
      %202 = vmatpush1.bf16.msra.mxu0 0
      %203 = vmatprep.subr.bf16.mxu0 0
      %204 = vmatpush1.bf16.msra.mxu0 0
      %205 = vmatprep.subr.bf16.mxu0 0
      %206 = vmatpush1.bf16.msra.mxu0 0
      %207 = vmatprep.subr.bf16.mxu0 0
      %208 = vmatpush1.bf16.msra.mxu0 0
      %209 = vmatprep.subr.bf16.mxu0 0
      %210 = vmatpush1.bf16.msra.mxu0 0
      %211 = vmatprep.subr.bf16.mxu0 0
      %212 = vmatpush1.bf16.msra.mxu0 0
      %213 = vmatprep.subr.bf16.mxu0 0
      %214 = vmatpush1.bf16.msra.mxu0 0
      %215 = vmatprep.subr.bf16.mxu0 0
      %216 = vmatpush1.bf16.msra.mxu0 0
      %217 = vmatprep.subr.bf16.mxu0 0
      %218 = vmatpush1.bf16.msra.mxu0 0
      %219 = vmatprep.mubr.bf16.mxu0 0
      %220 = vmatmul.mubr.bf16.gmra.mrb[0].mxu0 %v181
      %v221 = vpop.f32.mrb[0].mxu0
      %v222 = vadd.f32 0.0, %v221
      %v223 = vpop.f32.mrb[0].mxu0
      %v224 = vpop.f32.mrb[0].mxu0
      %v225 = vpop.f32.mrb[0].mxu0
      %226 = vdwg.mxu0
      %v227 = vrcp.pop %v178
      %v228 = vmul.f32 %v222, %v227
      %v229 = vunpack.c.l.b16 %v116
      %v230 = vpack.c.b16 %v229, %v229
      %231 = vrot.lane.b32.xlu0 %v230, 96
      %v232 = vpop.permute.xlu0 %231
      %233 = vrot.lane.b32.xlu0 %v120, 96
      %v234 = vpop.permute.xlu0 %233
      %v236 = vsel %vm121, %v232, 0
      %v239 = vsel %vm121, %v234, 0
      %241 = vmatprep.subr.bf16.mxu0 0
      %242 = vmatpush1.bf16.xpose.msra.mxu0 %v239
      %243 = vmatprep.subr.bf16.mxu0 0
      %244 = vmatpush1.bf16.xpose.msra.mxu0 0
      %245 = vmatprep.subr.bf16.mxu0 0
      %246 = vmatpush1.bf16.xpose.msra.mxu0 0
      %247 = vmatprep.subr.bf16.mxu0 0
      %248 = vmatpush1.bf16.xpose.msra.mxu0 0
      %249 = vmatprep.subr.bf16.mxu0 0
      %250 = vmatpush1.bf16.xpose.msra.mxu0 0
      %251 = vmatprep.subr.bf16.mxu0 0
      %252 = vmatpush1.bf16.xpose.msra.mxu0 0
      %253 = vmatprep.subr.bf16.mxu0 0
      %254 = vmatpush1.bf16.xpose.msra.mxu0 0
      %255 = vmatprep.subr.bf16.mxu0 0
      %256 = vmatpush1.bf16.xpose.msra.mxu0 0
      %257 = vmatprep.subr.bf16.mxu0 0
      %258 = vmatpush1.bf16.xpose.msra.mxu0 0
      %259 = vmatprep.subr.bf16.mxu0 0
      %260 = vmatpush1.bf16.xpose.msra.mxu0 0
      %261 = vmatprep.subr.bf16.mxu0 0
      %262 = vmatpush1.bf16.xpose.msra.mxu0 0
      %263 = vmatprep.subr.bf16.mxu0 0
      %264 = vmatpush1.bf16.xpose.msra.mxu0 0
      %265 = vmatprep.subr.bf16.mxu0 0
      %266 = vmatpush1.bf16.xpose.msra.mxu0 0
      %267 = vmatprep.subr.bf16.mxu0 0
      %268 = vmatpush1.bf16.xpose.msra.mxu0 0
      %269 = vmatprep.subr.bf16.mxu0 0
      %270 = vmatpush1.bf16.xpose.msra.mxu0 0
      %271 = vmatprep.subr.bf16.mxu0 0
      %272 = vmatpush1.bf16.xpose.msra.mxu0 0
      %273 = vmatprep.mubr.bf16.mxu0 0
      %274 = vmatmul.mubr.bf16.gmra.mrb[0].mxu0 %v236
      %v275 = vpop.f32.mrb[0].mxu0
      %v276 = vadd.f32 0.0, %v275
      %v277 = vpop.f32.mrb[0].mxu0
      %v278 = vpop.f32.mrb[0].mxu0
      %v279 = vpop.f32.mrb[0].mxu0
      %280 = vdwg.mxu0
      %v281 = vmul.f32 %v276, 0.17677669
      %v282 = vsel %vm169, %v281, -inf
      %283 = vmax.xlane.f32.xlu0 %v282
      %v284 = vpop.xlane.xlu0 %283
      %v285 = vsub.f32 %v281, %v284
      %v286 = vmul.f32 %v285, 1.442695
      %v287 = vpow.pop %v286
      %v288 = vsel %vm169, %v287, 0.0
      %289 = vadd.xlane.f32.xlu0 %v288
      %v290 = vpop.xlane.xlu0 %289
      %v291 = vpack.c.bf16 %v287, %v287
      %v293 = vunpack.c.l.b16 %v117
      %v294 = vpack.c.b16 %v293, %v293
      %295 = vrot.lane.b32.xlu0 %v294, 96
      %v296 = vpop.permute.xlu0 %295
      %v298 = vsel %vm169, %v291, 0
      %v301 = vsel %vm183, %v296, 0
      %303 = vmatprep.subr.bf16.mxu0 0
      %304 = vmatpush1.bf16.msra.mxu0 %v301
      %305 = vmatprep.subr.bf16.mxu0 0
      %306 = vmatpush1.bf16.msra.mxu0 0
      %307 = vmatprep.subr.bf16.mxu0 0
      %308 = vmatpush1.bf16.msra.mxu0 0
      %309 = vmatprep.subr.bf16.mxu0 0
      %310 = vmatpush1.bf16.msra.mxu0 0
      %311 = vmatprep.subr.bf16.mxu0 0
      %312 = vmatpush1.bf16.msra.mxu0 0
      %313 = vmatprep.subr.bf16.mxu0 0
      %314 = vmatpush1.bf16.msra.mxu0 0
      %315 = vmatprep.subr.bf16.mxu0 0
      %316 = vmatpush1.bf16.msra.mxu0 0
      %317 = vmatprep.subr.bf16.mxu0 0
      %318 = vmatpush1.bf16.msra.mxu0 0
      %319 = vmatprep.subr.bf16.mxu0 0
      %320 = vmatpush1.bf16.msra.mxu0 0
      %321 = vmatprep.subr.bf16.mxu0 0
      %322 = vmatpush1.bf16.msra.mxu0 0
      %323 = vmatprep.subr.bf16.mxu0 0
      %324 = vmatpush1.bf16.msra.mxu0 0
      %325 = vmatprep.subr.bf16.mxu0 0
      %326 = vmatpush1.bf16.msra.mxu0 0
      %327 = vmatprep.subr.bf16.mxu0 0
      %328 = vmatpush1.bf16.msra.mxu0 0
      %329 = vmatprep.subr.bf16.mxu0 0
      %330 = vmatpush1.bf16.msra.mxu0 0
      %331 = vmatprep.subr.bf16.mxu0 0
      %332 = vmatpush1.bf16.msra.mxu0 0
      %333 = vmatprep.subr.bf16.mxu0 0
      %334 = vmatpush1.bf16.msra.mxu0 0
      %335 = vmatprep.mubr.bf16.mxu0 0
      %336 = vmatmul.mubr.bf16.gmra.mrb[0].mxu0 %v298
      %v337 = vpop.f32.mrb[0].mxu0
      %v338 = vadd.f32 0.0, %v337
      %v339 = vpop.f32.mrb[0].mxu0
      %v340 = vpop.f32.mrb[0].mxu0
      %v341 = vpop.f32.mrb[0].mxu0
      %342 = vdwg.mxu0
      %v343 = vrcp.pop %v290
      %v344 = vmul.f32 %v338, %v343
      %345 = vrot.lane.b32.xlu0 %v230, 64
      %v346 = vpop.permute.xlu0 %345
      %347 = vrot.lane.b32.xlu0 %v120, 64
      %v348 = vpop.permute.xlu0 %347
      %v350 = vsel %vm121, %v346, 0
      %v353 = vsel %vm121, %v348, 0
      %355 = vmatprep.subr.bf16.mxu0 0
      %356 = vmatpush1.bf16.xpose.msra.mxu0 %v353
      %357 = vmatprep.subr.bf16.mxu0 0
      %358 = vmatpush1.bf16.xpose.msra.mxu0 0
      %359 = vmatprep.subr.bf16.mxu0 0
      %360 = vmatpush1.bf16.xpose.msra.mxu0 0
      %361 = vmatprep.subr.bf16.mxu0 0
      %362 = vmatpush1.bf16.xpose.msra.mxu0 0
      %363 = vmatprep.subr.bf16.mxu0 0
      %364 = vmatpush1.bf16.xpose.msra.mxu0 0
      %365 = vmatprep.subr.bf16.mxu0 0
      %366 = vmatpush1.bf16.xpose.msra.mxu0 0
      %367 = vmatprep.subr.bf16.mxu0 0
      %368 = vmatpush1.bf16.xpose.msra.mxu0 0
      %369 = vmatprep.subr.bf16.mxu0 0
      %370 = vmatpush1.bf16.xpose.msra.mxu0 0
      %371 = vmatprep.subr.bf16.mxu0 0
      %372 = vmatpush1.bf16.xpose.msra.mxu0 0
      %373 = vmatprep.subr.bf16.mxu0 0
      %374 = vmatpush1.bf16.xpose.msra.mxu0 0
      %375 = vmatprep.subr.bf16.mxu0 0
      %376 = vmatpush1.bf16.xpose.msra.mxu0 0
      %377 = vmatprep.subr.bf16.mxu0 0
      %378 = vmatpush1.bf16.xpose.msra.mxu0 0
      %379 = vmatprep.subr.bf16.mxu0 0
      %380 = vmatpush1.bf16.xpose.msra.mxu0 0
      %381 = vmatprep.subr.bf16.mxu0 0
      %382 = vmatpush1.bf16.xpose.msra.mxu0 0
      %383 = vmatprep.subr.bf16.mxu0 0
      %384 = vmatpush1.bf16.xpose.msra.mxu0 0
      %385 = vmatprep.subr.bf16.mxu0 0
      %386 = vmatpush1.bf16.xpose.msra.mxu0 0
      %387 = vmatprep.mubr.bf16.mxu0 0
      %388 = vmatmul.mubr.bf16.gmra.mrb[0].mxu0 %v350
      %v389 = vpop.f32.mrb[0].mxu0
      %v390 = vadd.f32 0.0, %v389
      %v391 = vpop.f32.mrb[0].mxu0
      %v392 = vpop.f32.mrb[0].mxu0
      %v393 = vpop.f32.mrb[0].mxu0
      %394 = vdwg.mxu0
      %v395 = vmul.f32 %v390, 0.17677669
      %v396 = vsel %vm169, %v395, -inf
      %397 = vmax.xlane.f32.xlu0 %v396
      %v398 = vpop.xlane.xlu0 %397
      %v399 = vsub.f32 %v395, %v398
      %v400 = vmul.f32 %v399, 1.442695
      %v401 = vpow.pop %v400
      %v402 = vsel %vm169, %v401, 0.0
      %403 = vadd.xlane.f32.xlu0 %v402
      %v404 = vpop.xlane.xlu0 %403
      %v405 = vpack.c.bf16 %v401, %v401
      %406 = vrot.lane.b32.xlu0 %v294, 64
      %v407 = vpop.permute.xlu0 %406
      %v409 = vsel %vm169, %v405, 0
      %v412 = vsel %vm183, %v407, 0
      %414 = vmatprep.subr.bf16.mxu0 0
      %415 = vmatpush1.bf16.msra.mxu0 %v412
      %416 = vmatprep.subr.bf16.mxu0 0
      %417 = vmatpush1.bf16.msra.mxu0 0
      %418 = vmatprep.subr.bf16.mxu0 0
      %419 = vmatpush1.bf16.msra.mxu0 0
      %420 = vmatprep.subr.bf16.mxu0 0
      %421 = vmatpush1.bf16.msra.mxu0 0
      %422 = vmatprep.subr.bf16.mxu0 0
      %423 = vmatpush1.bf16.msra.mxu0 0
      %424 = vmatprep.subr.bf16.mxu0 0
      %425 = vmatpush1.bf16.msra.mxu0 0
      %426 = vmatprep.subr.bf16.mxu0 0
      %427 = vmatpush1.bf16.msra.mxu0 0
      %428 = vmatprep.subr.bf16.mxu0 0
      %429 = vmatpush1.bf16.msra.mxu0 0
      %430 = vmatprep.subr.bf16.mxu0 0
      %431 = vmatpush1.bf16.msra.mxu0 0
      %432 = vmatprep.subr.bf16.mxu0 0
      %433 = vmatpush1.bf16.msra.mxu0 0
      %434 = vmatprep.subr.bf16.mxu0 0
      %435 = vmatpush1.bf16.msra.mxu0 0
      %436 = vmatprep.subr.bf16.mxu0 0
      %437 = vmatpush1.bf16.msra.mxu0 0
      %438 = vmatprep.subr.bf16.mxu0 0
      %439 = vmatpush1.bf16.msra.mxu0 0
      %440 = vmatprep.subr.bf16.mxu0 0
      %441 = vmatpush1.bf16.msra.mxu0 0
      %442 = vmatprep.subr.bf16.mxu0 0
      %443 = vmatpush1.bf16.msra.mxu0 0
      %444 = vmatprep.subr.bf16.mxu0 0
      %445 = vmatpush1.bf16.msra.mxu0 0
      %446 = vmatprep.mubr.bf16.mxu0 0
      %447 = vmatmul.mubr.bf16.gmra.mrb[0].mxu0 %v409
      %v448 = vpop.f32.mrb[0].mxu0
      %v449 = vadd.f32 0.0, %v448
      %v450 = vpop.f32.mrb[0].mxu0
      %v451 = vpop.f32.mrb[0].mxu0
      %v452 = vpop.f32.mrb[0].mxu0
      %453 = vdwg.mxu0
      %v454 = vrcp.pop %v404
      %v455 = vmul.f32 %v449, %v454
      %456 = vrot.lane.b32.xlu0 %v230, 32
      %v457 = vpop.permute.xlu0 %456
      %458 = vrot.lane.b32.xlu0 %v120, 32
      %v459 = vpop.permute.xlu0 %458
      %v461 = vsel %vm121, %v457, 0
      %v464 = vsel %vm121, %v459, 0
      %466 = vmatprep.subr.bf16.mxu0 0
      %467 = vmatpush1.bf16.xpose.msra.mxu0 %v464
      %468 = vmatprep.subr.bf16.mxu0 0
      %469 = vmatpush1.bf16.xpose.msra.mxu0 0
      %470 = vmatprep.subr.bf16.mxu0 0
      %471 = vmatpush1.bf16.xpose.msra.mxu0 0
      %472 = vmatprep.subr.bf16.mxu0 0
      %473 = vmatpush1.bf16.xpose.msra.mxu0 0
      %474 = vmatprep.subr.bf16.mxu0 0
      %475 = vmatpush1.bf16.xpose.msra.mxu0 0
      %476 = vmatprep.subr.bf16.mxu0 0
      %477 = vmatpush1.bf16.xpose.msra.mxu0 0
      %478 = vmatprep.subr.bf16.mxu0 0
      %479 = vmatpush1.bf16.xpose.msra.mxu0 0
      %480 = vmatprep.subr.bf16.mxu0 0
      %481 = vmatpush1.bf16.xpose.msra.mxu0 0
      %482 = vmatprep.subr.bf16.mxu0 0
      %483 = vmatpush1.bf16.xpose.msra.mxu0 0
      %484 = vmatprep.subr.bf16.mxu0 0
      %485 = vmatpush1.bf16.xpose.msra.mxu0 0
      %486 = vmatprep.subr.bf16.mxu0 0
      %487 = vmatpush1.bf16.xpose.msra.mxu0 0
      %488 = vmatprep.subr.bf16.mxu0 0
      %489 = vmatpush1.bf16.xpose.msra.mxu0 0
      %490 = vmatprep.subr.bf16.mxu0 0
      %491 = vmatpush1.bf16.xpose.msra.mxu0 0
      %492 = vmatprep.subr.bf16.mxu0 0
      %493 = vmatpush1.bf16.xpose.msra.mxu0 0
      %494 = vmatprep.subr.bf16.mxu0 0
      %495 = vmatpush1.bf16.xpose.msra.mxu0 0
      %496 = vmatprep.subr.bf16.mxu0 0
      %497 = vmatpush1.bf16.xpose.msra.mxu0 0
      %498 = vmatprep.mubr.bf16.mxu0 0
      %499 = vmatmul.mubr.bf16.gmra.mrb[0].mxu0 %v461
      %v500 = vpop.f32.mrb[0].mxu0
      %v501 = vadd.f32 0.0, %v500
      %v502 = vpop.f32.mrb[0].mxu0
      %v503 = vpop.f32.mrb[0].mxu0
      %v504 = vpop.f32.mrb[0].mxu0
      %505 = vdwg.mxu0
      %v506 = vmul.f32 %v501, 0.17677669
      %v507 = vsel %vm169, %v506, -inf
      %508 = vmax.xlane.f32.xlu0 %v507
      %v509 = vpop.xlane.xlu0 %508
      %v510 = vsub.f32 %v506, %v509
      %v511 = vmul.f32 %v510, 1.442695
      %v512 = vpow.pop %v511
      %v513 = vsel %vm169, %v512, 0.0
      %514 = vadd.xlane.f32.xlu0 %v513
      %v515 = vpop.xlane.xlu0 %514
      %v516 = vpack.c.bf16 %v512, %v512
      %517 = vrot.lane.b32.xlu0 %v294, 32
      %v518 = vpop.permute.xlu0 %517
      %v520 = vsel %vm169, %v516, 0
      %v523 = vsel %vm183, %v518, 0
      %525 = vmatprep.subr.bf16.mxu0 0
      %526 = vmatpush1.bf16.msra.mxu0 %v523
      %527 = vmatprep.subr.bf16.mxu0 0
      %528 = vmatpush1.bf16.msra.mxu0 0
      %529 = vmatprep.subr.bf16.mxu0 0
      %530 = vmatpush1.bf16.msra.mxu0 0
      %531 = vmatprep.subr.bf16.mxu0 0
      %532 = vmatpush1.bf16.msra.mxu0 0
      %533 = vmatprep.subr.bf16.mxu0 0
      %534 = vmatpush1.bf16.msra.mxu0 0
      %535 = vmatprep.subr.bf16.mxu0 0
      %536 = vmatpush1.bf16.msra.mxu0 0
      %537 = vmatprep.subr.bf16.mxu0 0
      %538 = vmatpush1.bf16.msra.mxu0 0
      %539 = vmatprep.subr.bf16.mxu0 0
      %540 = vmatpush1.bf16.msra.mxu0 0
      %541 = vmatprep.subr.bf16.mxu0 0
      %542 = vmatpush1.bf16.msra.mxu0 0
      %543 = vmatprep.subr.bf16.mxu0 0
      %544 = vmatpush1.bf16.msra.mxu0 0
      %545 = vmatprep.subr.bf16.mxu0 0
      %546 = vmatpush1.bf16.msra.mxu0 0
      %547 = vmatprep.subr.bf16.mxu0 0
      %548 = vmatpush1.bf16.msra.mxu0 0
      %549 = vmatprep.subr.bf16.mxu0 0
      %550 = vmatpush1.bf16.msra.mxu0 0
      %551 = vmatprep.subr.bf16.mxu0 0
      %552 = vmatpush1.bf16.msra.mxu0 0
      %553 = vmatprep.subr.bf16.mxu0 0
      %554 = vmatpush1.bf16.msra.mxu0 0
      %555 = vmatprep.subr.bf16.mxu0 0
      %556 = vmatpush1.bf16.msra.mxu0 0
      %557 = vmatprep.mubr.bf16.mxu0 0
      %558 = vmatmul.mubr.bf16.gmra.mrb[0].mxu0 %v520
      %v559 = vpop.f32.mrb[0].mxu0
      %v560 = vadd.f32 0.0, %v559
      %v561 = vpop.f32.mrb[0].mxu0
      %v562 = vpop.f32.mrb[0].mxu0
      %v563 = vpop.f32.mrb[0].mxu0
      %564 = vdwg.mxu0
      %v565 = vrcp.pop %v515
      %v566 = vmul.f32 %v560, %v565
      %568 = vrot.lane.b32.xlu0 %v344, 32
      %v569 = vpop.permute.xlu0 %568
      %572 = vrot.lane.b32.xlu0 %v455, 64
      %v573 = vpop.permute.xlu0 %572
      %576 = vrot.lane.b32.xlu0 %v566, 96
      %v577 = vpop.permute.xlu0 %576
      %v579 = vsel %vm121, %v228, %v569
      %vm580 = vcmask 523264
      %v581 = vsel %vm580, %v579, %v573
      %vm582 = vcmask 785408
      %v583 = vsel %vm582, %v581, %v577
      %v584 = vpack.c.bf16 %v583, %v583
      %585 = vst [vmem:[%s114] sm:$0xf] %v584
      %p586 = scmp.lt.s32.totalorder %s12, 1
      %s587 = scalar_select %p586, %s12, 1
      %s588 = smul.addr %s587, 4
      %s589 = scalar_lea.vmem %s1, %s588
      // Predicated region
      $region25: #{_lambda_.15} parent=23 // pred_check
        %p590 = pneg %p56
      $region26: #{_lambda_.15} parent=23 // pred_check_branch
        %592 = sbr.rel (%p590) target = $region28
      $region27: #{_lambda_.15} parent=23 // pred_region
        _
      $region28: #{_lambda_.15} parent=23 // pred_fallthru
        _
    $region24: #{_lambda_.15} parent=5 // pred_fallthru
      _
    %p593 = scmp.le.s32.totalorder 2, %s7
    // Predicated region
    $region29: #{_lambda_.15} parent=5 // pred_check
      %p594 = pneg %p593
    $region30: #{_lambda_.15} parent=5 // pred_check_branch
      %596 = sbr.rel (%p594) target = $region32
    $region31: #{_lambda_.15} parent=5 // pred_region
      %s597 = ssub.s32 %s7, 2
      // Predicated region
      $region33: #{_lambda_.15} parent=31 // pred_check
        %p598 = pneg %p62
      $region34: #{_lambda_.15} parent=31 // pred_check_branch
        %600 = sbr.rel (%p598) target = $region36
      $region35: #{_lambda_.15} parent=31 // pred_region
        %p601 = scmp.lt.s32.totalorder %s13, 1
        %s602 = scalar_select %p601, %s13, 1
        %s603 = smul.addr %s602, 4
        %s604 = scalar_lea.vmem %s1, %s603
      $region36: #{_lambda_.15} parent=31 // pred_fallthru
        _
    $region32: #{_lambda_.15} parent=5 // pred_fallthru
      _
  $region6: #{_lambda_.15} parent=0 // loop_footer
    %s11 = sadd.s32 1, %s7
  $region7: #{_lambda_.15} parent=0 // loop_footer_branch
    %6 = sbr.rel target = $region3
  $region8: #{_lambda_.15} parent=0 // loop_exit
    _

// kernel: _lambda_.18
$region0: #{_lambda_.18}
  #allocation0 [shape = 'u32[]', space=smem, size = 0x4, offset = 0x4, fixed_abs, tag = 'smem constant byte address 0x4 - core index']
  #allocation1 [shape = 'u32[144,128]{1,0:T(1,128)}', space=vmem, size = 0x12000, scoped, tag = 'internal scratch']
  %s0 = inlined_call_operand.vmem [shape: f32[16,128], index: 0, kind: input, shape index: {}]
  %s1 = inlined_call_operand.vmem [shape: bf16[256,128], index: 1, kind: input, shape index: {}]
  %s2 = inlined_call_operand.vmem [shape: f32[1,256], index: 2, kind: input, shape index: {}]
  %s3 = inlined_call_operand.vmem [shape: bf16[16,256], index: 3, kind: output, shape index: {}]
  %s4 = sld [smem:[#allocation0]]
  $region22: #{_lambda_.18} parent=0
    _
  %s6 = ssub.s32 1, %s4
  %s7 = scalar_select 0, %s6, %s4
  // Predicated region
  $region2: #{_lambda_.18} parent=0 // pred_check
    _
  $region3: #{_lambda_.18} parent=0 // pred_check_branch
    %9 = sbr.rel (0) target = $region5
  $region4: #{_lambda_.18} parent=0 // pred_region
    _
  $region5: #{_lambda_.18} parent=0 // pred_fallthru
    _
  // Predicated region
  $region6: #{_lambda_.18} parent=0 // pred_check
    _
  $region7: #{_lambda_.18} parent=0 // pred_check_branch
    %11 = sbr.rel (0) target = $region9
  $region8: #{_lambda_.18} parent=0 // pred_region
    _
  $region9: #{_lambda_.18} parent=0 // pred_fallthru
    _
  // Predicated region
  $region10: #{_lambda_.18} parent=0 // pred_check
    _
  $region11: #{_lambda_.18} parent=0 // pred_check_branch
    %13 = sbr.rel (0) target = $region13
  $region12: #{_lambda_.18} parent=0 // pred_region
    _
  $region13: #{_lambda_.18} parent=0 // pred_fallthru
    _
  %v15 = vld [vmem:[%s0] sm:$0xff]
  %v16 = vld [vmem:[%s0 + $0x8] sm:$0xff]
  %v17 = vpack.c.bf16 %v16, %v15
  %v18 = vld [vmem:[%s1] sm:$0xf]
  %v19 = vld [vmem:[%s1 + $0x4] sm:$0xf]
  %v20 = vld [vmem:[%s1 + $0x8] sm:$0xf]
  %v21 = vld [vmem:[%s1 + $0xc] sm:$0xf]
  %v22 = vld [vmem:[%s1 + $0x10] sm:$0xf]
  %v23 = vld [vmem:[%s1 + $0x14] sm:$0xf]
  %v24 = vld [vmem:[%s1 + $0x18] sm:$0xf]
  %v25 = vld [vmem:[%s1 + $0x1c] sm:$0xf]
  %v26 = vld [vmem:[%s1 + $0x20] sm:$0xf]
  %v27 = vld [vmem:[%s1 + $0x24] sm:$0xf]
  %v28 = vld [vmem:[%s1 + $0x28] sm:$0xf]
  %v29 = vld [vmem:[%s1 + $0x2c] sm:$0xf]
  %v30 = vld [vmem:[%s1 + $0x30] sm:$0xf]
  %v31 = vld [vmem:[%s1 + $0x34] sm:$0xf]
  %v32 = vld [vmem:[%s1 + $0x38] sm:$0xf]
  %v33 = vld [vmem:[%s1 + $0x3c] sm:$0xf]
  %v34 = vld [vmem:[%s1 + $0x40] sm:$0xf]
  %v35 = vld [vmem:[%s1 + $0x44] sm:$0xf]
  %v36 = vld [vmem:[%s1 + $0x48] sm:$0xf]
  %v37 = vld [vmem:[%s1 + $0x4c] sm:$0xf]
  %v38 = vld [vmem:[%s1 + $0x50] sm:$0xf]
  %v39 = vld [vmem:[%s1 + $0x54] sm:$0xf]
  %v40 = vld [vmem:[%s1 + $0x58] sm:$0xf]
  %v41 = vld [vmem:[%s1 + $0x5c] sm:$0xf]
  %v42 = vld [vmem:[%s1 + $0x60] sm:$0xf]
  %v43 = vld [vmem:[%s1 + $0x64] sm:$0xf]
  %v44 = vld [vmem:[%s1 + $0x68] sm:$0xf]
  %v45 = vld [vmem:[%s1 + $0x6c] sm:$0xf]
  %v46 = vld [vmem:[%s1 + $0x70] sm:$0xf]
  %v47 = vld [vmem:[%s1 + $0x74] sm:$0xf]
  %v48 = vld [vmem:[%s1 + $0x78] sm:$0xf]
  %v49 = vld [vmem:[%s1 + $0x7c] sm:$0xf]
  %v50 = vld [vmem:[%s2] sm:$0x3]
  %v52 = vlaneseq
  %v53 = vshrl.u32 %v52, 7
  %v54 = vsub.s32 0, %v53
  %v55 = vrot.slane %v50, %v54
  %v56 = vlaneseq
  %v57 = vshrl.u32 %v56, 7
  %v58 = vsub.s32 1, %v57
  %v59 = vrot.slane %v50, %v58
  %v94 = vunpack.c.l.b16 %v18
  %v95 = vunpack.c.l.b16 %v19
  %v96 = vunpack.c.l.b16 %v20
  %v97 = vunpack.c.l.b16 %v21
  %v98 = vunpack.c.l.b16 %v22
  %v99 = vunpack.c.l.b16 %v23
  %v100 = vunpack.c.l.b16 %v24
  %v101 = vunpack.c.l.b16 %v25
  %v102 = vunpack.c.l.b16 %v26
  %v103 = vunpack.c.l.b16 %v27
  %v104 = vunpack.c.l.b16 %v28
  %v105 = vunpack.c.l.b16 %v29
  %v106 = vunpack.c.l.b16 %v30
  %v107 = vunpack.c.l.b16 %v31
  %v108 = vunpack.c.l.b16 %v32
  %v109 = vunpack.c.l.b16 %v33
  %v110 = vunpack.c.l.b16 %v34
  %v111 = vunpack.c.l.b16 %v35
  %v112 = vunpack.c.l.b16 %v36
  %v113 = vunpack.c.l.b16 %v37
  %v114 = vunpack.c.l.b16 %v38
  %v115 = vunpack.c.l.b16 %v39
  %v116 = vunpack.c.l.b16 %v40
  %v117 = vunpack.c.l.b16 %v41
  %v118 = vunpack.c.l.b16 %v42
  %v119 = vunpack.c.l.b16 %v43
  %v120 = vunpack.c.l.b16 %v44
  %v121 = vunpack.c.l.b16 %v45
  %v122 = vunpack.c.l.b16 %v46
  %v123 = vunpack.c.l.b16 %v47
  %v124 = vunpack.c.l.b16 %v48
  %v125 = vunpack.c.l.b16 %v49
  %v126 = vpack.c.b16 %v95, %v94
  %v127 = vpack.c.b16 %v97, %v96
  %v128 = vpack.c.b16 %v99, %v98
  %v129 = vpack.c.b16 %v101, %v100
  %v130 = vpack.c.b16 %v103, %v102
  %v131 = vpack.c.b16 %v105, %v104
  %v132 = vpack.c.b16 %v107, %v106
  %v133 = vpack.c.b16 %v109, %v108
  %v134 = vpack.c.b16 %v111, %v110
  %v135 = vpack.c.b16 %v113, %v112
  %v136 = vpack.c.b16 %v115, %v114
  %v137 = vpack.c.b16 %v117, %v116
  %v138 = vpack.c.b16 %v119, %v118
  %v139 = vpack.c.b16 %v121, %v120
  %v140 = vpack.c.b16 %v123, %v122
  %v141 = vpack.c.b16 %v125, %v124
  %158 = vmatprep.subr.bf16.mxu0 0
  %159 = vmatpush1.bf16.xpose.msra.mxu0 %v126
  %160 = vmatprep.subr.bf16.mxu0 0
  %161 = vmatpush1.bf16.xpose.msra.mxu0 %v127
  %162 = vmatprep.subr.bf16.mxu0 0
  %163 = vmatpush1.bf16.xpose.msra.mxu0 %v128
  %164 = vmatprep.subr.bf16.mxu0 0
  %165 = vmatpush1.bf16.xpose.msra.mxu0 %v129
  %166 = vmatprep.subr.bf16.mxu0 0
  %167 = vmatpush1.bf16.xpose.msra.mxu0 %v130
  %168 = vmatprep.subr.bf16.mxu0 0
  %169 = vmatpush1.bf16.xpose.msra.mxu0 %v131
  %170 = vmatprep.subr.bf16.mxu0 0
  %171 = vmatpush1.bf16.xpose.msra.mxu0 %v132
  %172 = vmatprep.subr.bf16.mxu0 0
  %173 = vmatpush1.bf16.xpose.msra.mxu0 %v133
  %174 = vmatprep.subr.bf16.mxu0 0
  %175 = vmatpush1.bf16.xpose.msra.mxu0 %v134
  %176 = vmatprep.subr.bf16.mxu0 0
  %177 = vmatpush1.bf16.xpose.msra.mxu0 %v135
  %178 = vmatprep.subr.bf16.mxu0 0
  %179 = vmatpush1.bf16.xpose.msra.mxu0 %v136
  %180 = vmatprep.subr.bf16.mxu0 0
  %181 = vmatpush1.bf16.xpose.msra.mxu0 %v137
  %182 = vmatprep.subr.bf16.mxu0 0
  %183 = vmatpush1.bf16.xpose.msra.mxu0 %v138
  %184 = vmatprep.subr.bf16.mxu0 0
  %185 = vmatpush1.bf16.xpose.msra.mxu0 %v139
  %186 = vmatprep.subr.bf16.mxu0 0
  %187 = vmatpush1.bf16.xpose.msra.mxu0 %v140
  %188 = vmatprep.subr.bf16.mxu0 0
  %189 = vmatpush1.bf16.xpose.msra.mxu0 %v141
  %190 = vmatprep.mubr.bf16.mxu0 0
  %191 = vmatmul.mubr.bf16.gmra.mrb[0].mxu0 %v17
  %v192 = vpop.f32.mrb[0].mxu0
  %v193 = vadd.f32 %v55, %v192
  %v194 = vpop.f32.mrb[0].mxu0
  %v195 = vadd.f32 %v59, %v194
  %v196 = vpop.f32.mrb[0].mxu0
  %v197 = vadd.f32 %v55, %v196
  %v198 = vpop.f32.mrb[0].mxu0
  %v199 = vadd.f32 %v59, %v198
  %200 = vdwg.mxu0
  %v201 = vmax.f32 %v193, 0.0
  %v202 = vmax.f32 %v195, 0.0
  %v203 = vmax.f32 %v197, 0.0
  %v204 = vmax.f32 %v199, 0.0
  %v205 = vpack.c.bf16 %v203, %v201
  %v206 = vpack.c.bf16 %v204, %v202
  %v209 = vunpack.c.l.b16 %v205
  %v210 = vunpack.c.l.b16 %v206
  %v211 = vunpack.c.h.b16 %v205
  %v212 = vunpack.c.h.b16 %v206
  %v213 = vpack.c.b16 %v210, %v209
  %v214 = vpack.c.b16 %v212, %v211
  %217 = vst [vmem:[%s3] sm:$0xff] %v213
  %218 = vst [vmem:[%s3 + $0x8] sm:$0xff] %v214
  // Predicated region
  $region14: #{_lambda_.18} parent=0 // pred_check
    _
  $region15: #{_lambda_.18} parent=0 // pred_check_branch
    %220 = sbr.rel (0) target = $region17
  $region16: #{_lambda_.18} parent=0 // pred_region
    _
  $region17: #{_lambda_.18} parent=0 // pred_fallthru
    _
  // Predicated region
  $region18: #{_lambda_.18} parent=0 // pred_check
    _
  $region19: #{_lambda_.18} parent=0 // pred_check_branch
    %222 = sbr.rel (0) target = $region21
  $region20: #{_lambda_.18} parent=0 // pred_region
    _
  $region21: #{_lambda_.18} parent=0 // pred_fallthru
    _

// kernel: _lambda_.27
$region0: #{_lambda_.27}
  #allocation0 [shape = 'u32[]', space=smem, size = 0x4, offset = 0x4, fixed_abs, tag = 'smem constant byte address 0x4 - core index']
  #allocation1 [shape = 'u32[144,128]{1,0:T(1,128)}', space=vmem, size = 0x12000, scoped, tag = 'internal scratch']
  %s0 = inlined_call_operand.vmem [shape: f32[16,128], index: 0, kind: input, shape index: {}]
  %s1 = inlined_call_operand.vmem [shape: f32[16,128], index: 1, kind: input, shape index: {}]
  %s2 = inlined_call_operand.vmem [shape: f32[1,128], index: 2, kind: input, shape index: {}]
  %s3 = inlined_call_operand.vmem [shape: f32[1,128], index: 3, kind: input, shape index: {}]
  %s4 = inlined_call_operand.hbm [shape: f32[16,128], index: 4, kind: output, shape index: {}]
  %s5 = sld [smem:[#allocation0]]
  $region26: #{_lambda_.27} parent=0
    _
  %s7 = ssub.s32 1, %s5
  %s8 = scalar_select 0, %s7, %s5
  $region1: #{_lambda_.27} parent=0
    #allocation2 [shape = 'u8[8192]{0}', space=vmem, size = 0x2000, scoped, tag = 'output window, operand 0, single buffered']
    #allocation3 [shape = 's32[1]{0}', space=sflag, size = 0x4, scoped, tag = 'scoped memory for _lambda_.27']
    %9 = vsyncpa [#allocation3], 0
    // Predicated region
    $region2: #{_lambda_.27} parent=1 // pred_check
      _
    $region3: #{_lambda_.27} parent=1 // pred_check_branch
      %11 = sbr.rel (0) target = $region5
    $region4: #{_lambda_.27} parent=1 // pred_region
      _
    $region5: #{_lambda_.27} parent=1 // pred_fallthru
      _
    // Predicated region
    $region6: #{_lambda_.27} parent=1 // pred_check
      _
    $region7: #{_lambda_.27} parent=1 // pred_check_branch
      %13 = sbr.rel (0) target = $region9
    $region8: #{_lambda_.27} parent=1 // pred_region
      _
    $region9: #{_lambda_.27} parent=1 // pred_fallthru
      _
    // Predicated region
    $region10: #{_lambda_.27} parent=1 // pred_check
      _
    $region11: #{_lambda_.27} parent=1 // pred_check_branch
      %15 = sbr.rel (0) target = $region13
    $region12: #{_lambda_.27} parent=1 // pred_region
      _
    $region13: #{_lambda_.27} parent=1 // pred_fallthru
      _
    // Predicated region
    $region14: #{_lambda_.27} parent=1 // pred_check
      _
    $region15: #{_lambda_.27} parent=1 // pred_check_branch
      %17 = sbr.rel (0) target = $region17
    $region16: #{_lambda_.27} parent=1 // pred_region
      _
    $region17: #{_lambda_.27} parent=1 // pred_fallthru
      _
    %v18 = vld [vmem:[%s0] sm:$0xff]
    %v19 = vld [vmem:[%s0 + $0x8] sm:$0xff]
    %v20 = vld [vmem:[%s1] sm:$0xff]
    %v21 = vld [vmem:[%s1 + $0x8] sm:$0xff]
    %v22 = vadd.f32 %v18, %v20
    %v23 = vadd.f32 %v19, %v21
    %24 = vadd.xlane.f32.xlu0 %v22
    %v25 = vpop.xlane.xlu0 %24
    %26 = vadd.xlane.f32.xlu0 %v23
    %v27 = vpop.xlane.xlu0 %26
    %v28 = vrcp.pop 128.0
    %v29 = vmul.f32 %v25, %v28
    %v30 = vmul.f32 %v27, %v28
    %v31 = vsub.f32 %v22, %v29
    %v32 = vsub.f32 %v23, %v30
    %v33 = vmul.f32 %v31, %v31
    %v34 = vmul.f32 %v32, %v32
    %35 = vadd.xlane.f32.xlu0 %v33
    %v36 = vpop.xlane.xlu0 %35
    %37 = vadd.xlane.f32.xlu0 %v34
    %v38 = vpop.xlane.xlu0 %37
    %v39 = vmul.f32 %v36, %v28
    %v40 = vmul.f32 %v38, %v28
    %v41 = vadd.f32 %v39, 1e-05
    %v42 = vadd.f32 %v40, 1e-05
    %v43 = vrsqrt.pop %v41
    %v44 = vrsqrt.pop %v42
    %v45 = vmul.f32 %v31, %v43
    %v46 = vmul.f32 %v32, %v44
    %v47 = vld [vmem:[%s2] sm:$0x1]
    %v49 = vlaneseq
    %v50 = vshrl.u32 %v49, 7
    %v51 = vsub.s32 0, %v50
    %v52 = vrot.slane %v47, %v51
    %v54 = vmul.f32 %v45, %v52
    %v55 = vmul.f32 %v46, %v52
    %v56 = vld [vmem:[%s3] sm:$0x1]
    %v58 = vlaneseq
    %v59 = vshrl.u32 %v58, 7
    %v60 = vsub.s32 0, %v59
    %v61 = vrot.slane %v56, %v60
    %v63 = vadd.f32 %v54, %v61
    %v64 = vadd.f32 %v55, %v61
    %65 = vst [vmem:[#allocation2] sm:$0xff] %v63
    %66 = vst [vmem:[#allocation2 + $0x8] sm:$0xff] %v64
    // Predicated region
    $region18: #{_lambda_.27} parent=1 // pred_check
      _
    $region19: #{_lambda_.27} parent=1 // pred_check_branch
      %68 = sbr.rel (0) target = $region21
    $region20: #{_lambda_.27} parent=1 // pred_region
      %s70 = ssub.s32 256, 256
      %71 = vsyncadd [#allocation3], %s70
      %s72 = sshll.u32 [#allocation2], 4
      %s73 = int_to_ptr.vmem [resolvable:$true] %s72
      %78 = dma.vmem_to_hbm [thread:$0]  %s73, 256, %s4, [#allocation3], 128, 128, 8
    $region21: #{_lambda_.27} parent=1 // pred_fallthru
      _
    // Predicated region
    $region22: #{_lambda_.27} parent=1 // pred_check
      _
    $region23: #{_lambda_.27} parent=1 // pred_check_branch
      %80 = sbr.rel (0) target = $region25
    $region24: #{_lambda_.27} parent=1 // pred_region
      %81 = dma.done [#allocation3], 256
    $region25: #{_lambda_.27} parent=1 // pred_fallthru
      _
    %82 = vsyncpa [#allocation3], 1

// kernel: _lambda_.19
$region0: #{_lambda_.19}
  #allocation0 [shape = 'u32[]', space=smem, size = 0x4, offset = 0x4, fixed_abs, tag = 'smem constant byte address 0x4 - core index']
  #allocation1 [shape = 'u32[144,128]{1,0:T(1,128)}', space=vmem, size = 0x12000, scoped, tag = 'internal scratch']
  %s0 = inlined_call_operand.vmem [shape: bf16[16,256], index: 0, kind: input, shape index: {}]
  %s1 = inlined_call_operand.vmem [shape: bf16[128,256], index: 1, kind: input, shape index: {}]
  %s2 = inlined_call_operand.vmem [shape: f32[1,128], index: 2, kind: input, shape index: {}]
  %s3 = inlined_call_operand.vmem [shape: f32[16,128], index: 3, kind: output, shape index: {}]
  %s4 = sld [smem:[#allocation0]]
  $region22: #{_lambda_.19} parent=0
    _
  %s6 = ssub.s32 1, %s4
  %s7 = scalar_select 0, %s6, %s4
  // Predicated region
  $region2: #{_lambda_.19} parent=0 // pred_check
    _
  $region3: #{_lambda_.19} parent=0 // pred_check_branch
    %9 = sbr.rel (0) target = $region5
  $region4: #{_lambda_.19} parent=0 // pred_region
    _
  $region5: #{_lambda_.19} parent=0 // pred_fallthru
    _
  // Predicated region
  $region6: #{_lambda_.19} parent=0 // pred_check
    _
  $region7: #{_lambda_.19} parent=0 // pred_check_branch
    %11 = sbr.rel (0) target = $region9
  $region8: #{_lambda_.19} parent=0 // pred_region
    _
  $region9: #{_lambda_.19} parent=0 // pred_fallthru
    _
  // Predicated region
  $region10: #{_lambda_.19} parent=0 // pred_check
    _
  $region11: #{_lambda_.19} parent=0 // pred_check_branch
    %13 = sbr.rel (0) target = $region13
  $region12: #{_lambda_.19} parent=0 // pred_region
    _
  $region13: #{_lambda_.19} parent=0 // pred_fallthru
    _
  %v15 = vld [vmem:[%s0] sm:$0xff]
  %v16 = vld [vmem:[%s0 + $0x8] sm:$0xff]
  %v17 = vld [vmem:[%s1] sm:$0xff]
  %v18 = vld [vmem:[%s1 + $0x8] sm:$0xff]
  %v19 = vld [vmem:[%s1 + $0x10] sm:$0xff]
  %v20 = vld [vmem:[%s1 + $0x18] sm:$0xff]
  %v21 = vld [vmem:[%s1 + $0x20] sm:$0xff]
  %v22 = vld [vmem:[%s1 + $0x28] sm:$0xff]
  %v23 = vld [vmem:[%s1 + $0x30] sm:$0xff]
  %v24 = vld [vmem:[%s1 + $0x38] sm:$0xff]
  %v25 = vld [vmem:[%s1 + $0x40] sm:$0xff]
  %v26 = vld [vmem:[%s1 + $0x48] sm:$0xff]
  %v27 = vld [vmem:[%s1 + $0x50] sm:$0xff]
  %v28 = vld [vmem:[%s1 + $0x58] sm:$0xff]
  %v29 = vld [vmem:[%s1 + $0x60] sm:$0xff]
  %v30 = vld [vmem:[%s1 + $0x68] sm:$0xff]
  %v31 = vld [vmem:[%s1 + $0x70] sm:$0xff]
  %v32 = vld [vmem:[%s1 + $0x78] sm:$0xff]
  %v33 = vld [vmem:[%s2] sm:$0x1]
  %v35 = vlaneseq
  %v36 = vshrl.u32 %v35, 7
  %v37 = vsub.s32 0, %v36
  %v38 = vrot.slane %v33, %v37
  %v42 = vunpack.c.l.b16 %v15
  %v43 = vunpack.c.h.b16 %v15
  %v44 = vunpack.c.l.b16 %v16
  %v45 = vunpack.c.h.b16 %v16
  %v46 = vpack.c.b16 %v44, %v42
  %v47 = vpack.c.b16 %v45, %v43
  %v66 = vunpack.c.l.b16 %v17
  %v67 = vunpack.c.h.b16 %v17
  %v68 = vunpack.c.l.b16 %v18
  %v69 = vunpack.c.h.b16 %v18
  %v70 = vunpack.c.l.b16 %v19
  %v71 = vunpack.c.h.b16 %v19
  %v72 = vunpack.c.l.b16 %v20
  %v73 = vunpack.c.h.b16 %v20
  %v74 = vunpack.c.l.b16 %v21
  %v75 = vunpack.c.h.b16 %v21
  %v76 = vunpack.c.l.b16 %v22
  %v77 = vunpack.c.h.b16 %v22
  %v78 = vunpack.c.l.b16 %v23
  %v79 = vunpack.c.h.b16 %v23
  %v80 = vunpack.c.l.b16 %v24
  %v81 = vunpack.c.h.b16 %v24
  %v82 = vunpack.c.l.b16 %v25
  %v83 = vunpack.c.h.b16 %v25
  %v84 = vunpack.c.l.b16 %v26
  %v85 = vunpack.c.h.b16 %v26
  %v86 = vunpack.c.l.b16 %v27
  %v87 = vunpack.c.h.b16 %v27
  %v88 = vunpack.c.l.b16 %v28
  %v89 = vunpack.c.h.b16 %v28
  %v90 = vunpack.c.l.b16 %v29
  %v91 = vunpack.c.h.b16 %v29
  %v92 = vunpack.c.l.b16 %v30
  %v93 = vunpack.c.h.b16 %v30
  %v94 = vunpack.c.l.b16 %v31
  %v95 = vunpack.c.h.b16 %v31
  %v96 = vunpack.c.l.b16 %v32
  %v97 = vunpack.c.h.b16 %v32
  %v98 = vpack.c.b16 %v68, %v66
  %v99 = vpack.c.b16 %v69, %v67
  %v100 = vpack.c.b16 %v72, %v70
  %v101 = vpack.c.b16 %v73, %v71
  %v102 = vpack.c.b16 %v76, %v74
  %v103 = vpack.c.b16 %v77, %v75
  %v104 = vpack.c.b16 %v80, %v78
  %v105 = vpack.c.b16 %v81, %v79
  %v106 = vpack.c.b16 %v84, %v82
  %v107 = vpack.c.b16 %v85, %v83
  %v108 = vpack.c.b16 %v88, %v86
  %v109 = vpack.c.b16 %v89, %v87
  %v110 = vpack.c.b16 %v92, %v90
  %v111 = vpack.c.b16 %v93, %v91
  %v112 = vpack.c.b16 %v96, %v94
  %v113 = vpack.c.b16 %v97, %v95
  %130 = vmatprep.subr.bf16.mxu0 %v99
  %131 = vmatpush1.bf16.xpose.msra.mxu0 %v98
  %132 = vmatprep.subr.bf16.mxu0 %v101
  %133 = vmatpush1.bf16.xpose.msra.mxu0 %v100
  %134 = vmatprep.subr.bf16.mxu0 %v103
  %135 = vmatpush1.bf16.xpose.msra.mxu0 %v102
  %136 = vmatprep.subr.bf16.mxu0 %v105
  %137 = vmatpush1.bf16.xpose.msra.mxu0 %v104
  %138 = vmatprep.subr.bf16.mxu0 %v107
  %139 = vmatpush1.bf16.xpose.msra.mxu0 %v106
  %140 = vmatprep.subr.bf16.mxu0 %v109
  %141 = vmatpush1.bf16.xpose.msra.mxu0 %v108
  %142 = vmatprep.subr.bf16.mxu0 %v111
  %143 = vmatpush1.bf16.xpose.msra.mxu0 %v110
  %144 = vmatprep.subr.bf16.mxu0 %v113
  %145 = vmatpush1.bf16.xpose.msra.mxu0 %v112
  %146 = vmatprep.subr.bf16.mxu0 0
  %147 = vmatpush1.bf16.xpose.msra.mxu0 0
  %148 = vmatprep.subr.bf16.mxu0 0
  %149 = vmatpush1.bf16.xpose.msra.mxu0 0
  %150 = vmatprep.subr.bf16.mxu0 0
  %151 = vmatpush1.bf16.xpose.msra.mxu0 0
  %152 = vmatprep.subr.bf16.mxu0 0
  %153 = vmatpush1.bf16.xpose.msra.mxu0 0
  %154 = vmatprep.subr.bf16.mxu0 0
  %155 = vmatpush1.bf16.xpose.msra.mxu0 0
  %156 = vmatprep.subr.bf16.mxu0 0
  %157 = vmatpush1.bf16.xpose.msra.mxu0 0
  %158 = vmatprep.subr.bf16.mxu0 0
  %159 = vmatpush1.bf16.xpose.msra.mxu0 0
  %160 = vmatprep.subr.bf16.mxu0 0
  %161 = vmatpush1.bf16.xpose.msra.mxu0 0
  %162 = vmatprep.mubr.bf16.mxu0 %v47
  %163 = vmatmul.mubr.bf16.gmra.mrb[0].mxu0 %v46
  %v164 = vpop.f32.mrb[0].mxu0
  %v165 = vadd.f32 %v38, %v164
  %v166 = vpop.f32.mrb[0].mxu0
  %v167 = vpop.f32.mrb[0].mxu0
  %v168 = vadd.f32 %v38, %v167
  %v169 = vpop.f32.mrb[0].mxu0
  %170 = vdwg.mxu0
  %171 = vst [vmem:[%s3] sm:$0xff] %v165
  %172 = vst [vmem:[%s3 + $0x8] sm:$0xff] %v168
  // Predicated region
  $region14: #{_lambda_.19} parent=0 // pred_check
    _
  $region15: #{_lambda_.19} parent=0 // pred_check_branch
    %174 = sbr.rel (0) target = $region17
  $region16: #{_lambda_.19} parent=0 // pred_region
    _
  $region17: #{_lambda_.19} parent=0 // pred_fallthru
    _
  // Predicated region
  $region18: #{_lambda_.19} parent=0 // pred_check
    _
  $region19: #{_lambda_.19} parent=0 // pred_check_branch
    %176 = sbr.rel (0) target = $region21
  $region20: #{_lambda_.19} parent=0 // pred_region
    _
  $region21: #{_lambda_.19} parent=0 // pred_fallthru
    _

</llo_original>
